<compile_context>
chip_gen: v5e
topology: v5e:2x2
jax: 0.10.0
libtpu: 0.0.40
codegen_flags: <defaults>
</compile_context>

<pallas_src>
import functools

import numpy as np

import jax
import jax.numpy as jnp
from jax import lax
from jax.experimental import pallas as pl
from jax.experimental.pallas import tpu as pltpu


# ----------------------------- Pallas kernel --------------------------------


def _lstm_head_kernel(xg0_ref, whh0_ref, wih1_ref, whh1_ref, b1_ref, wout_ref,
                      bout_ref, out_ref, *, hidden_size):
    """2-layer LSTM recurrence + linear head on the last top-layer hidden state.

    Gate columns of every weight/bias/pre-activation are pre-permuted to
    [i, f, o, g] (see wrapper), so sigmoid covers lanes [0, 3H) and tanh lanes
    [3H, 4H).

    xg0_ref  : (S, B, 4H) f32   precomputed layer-0 gate pre-activations
                                (x_t @ Wih0_x + emb @ Wih0_emb + b_ih0 + b_hh0)
    whh0_ref : (H, 4H)   bf16   weight_hh_l0^T
    wih1_ref : (H, 4H)   bf16   weight_ih_l1^T
    whh1_ref : (H, 4H)   bf16   weight_hh_l1^T
    b1_ref   : (1, 4H)   f32    bias_ih_l1 + bias_hh_l1
    wout_ref : (1, H)    f32    output_layer.weight
    bout_ref : (1,)      f32    output_layer.bias   (SMEM scalar)
    out_ref  : (1, B)    f32    lane-dense output row
    """
    H = hidden_size
    S, B, G = xg0_ref.shape            # G == 4H

    whh0 = whh0_ref[...]               # bf16 MXU operands
    wih1 = wih1_ref[...]
    whh1 = whh1_ref[...]
    bout = bout_ref[0]                 # SMEM scalar

    # Hoist the layer-1 bias broadcast only while it is cheap to keep resident;
    # at tb=128 a (tb, 4H) f32 broadcast pins 16 vregs for the whole unrolled
    # loop, so keep the narrow row and let the adds sublane-broadcast it.
    if B * G * 4 <= 32 * 1024:         # <= 8 vregs
        b1 = jnp.broadcast_to(b1_ref[...], (B, G))
    else:
        b1 = b1_ref[...]

    def lstm_cell(gates, c):
        """Gate nonlinearities with columns ordered [i, f, o, g]. c=None <=> c==0."""
        s = jax.nn.sigmoid(gates[:, 0:3 * H])     # i, f, o : 3H lanes of EUP work
        g = jnp.tanh(gates[:, 3 * H:4 * H])       # g       : H lanes of EUP work
        ig = s[:, 0:H] * g
        c_new = ig if c is None else s[:, H:2 * H] * c + ig
        h_new = s[:, 2 * H:3 * H] * jnp.tanh(c_new)
        return h_new, c_new

    def bf16(v):
        return v.astype(jnp.bfloat16)

    # ---- t = 0: hidden/cell states are zero, recurrent matmuls vanish ----
    h0, c0 = lstm_cell(xg0_ref[0], None)
    g1 = jnp.dot(bf16(h0), wih1, preferred_element_type=jnp.float32) + b1
    h1, c1 = lstm_cell(g1, None)

    # ---- t = 1 .. S-1: statically unrolled time loop ----
    for t in range(1, S):
        # layer 0: input projection precomputed; only h0 @ Whh0 is recurrent
        g0 = xg0_ref[t] + jnp.dot(bf16(h0), whh0,
                                  preferred_element_type=jnp.float32)
        h0, c0 = lstm_cell(g0, c0)
        # layer 1: two small bf16 dots (no per-step lane concat)
        g1 = (jnp.dot(bf16(h0), wih1, preferred_element_type=jnp.float32)
              + jnp.dot(bf16(h1), whh1, preferred_element_type=jnp.float32)
              + b1)
        h1, c1 = lstm_cell(g1, c1)

    # Head: VPU lane reduction (N=1 matmul would waste the MXU), then a small
    # transpose (XLU is idle) so the store is a lane-dense unmasked vst.
    res = jnp.sum(h1 * wout_ref[...], axis=1, keepdims=True) + bout   # (B, 1)
    out_ref[...] = jnp.transpose(res).astype(out_ref.dtype)           # (1, B)


# ------------------------------ JAX wrapper ----------------------------------


def _gate_perm(H):
    """Column permutation taking PyTorch gate order [i, f, g, o] -> [i, f, o, g]."""
    return np.concatenate([
        np.arange(0, 2 * H),        # i, f
        np.arange(3 * H, 4 * H),    # o
        np.arange(2 * H, 3 * H),    # g
    ])


def _batch_tiling(B):
    """Return (padded_B, batch_tile).

    Small batches pad to 8 (fill the sublanes); larger ones pad to a multiple
    of 8 (single program) or, above 128, to a multiple of 128 with 128-row
    tiles (fills MXU M on all generations, >=2 programs so both v7x
    TensorCores get work, and keeps the lane-dense output block 128-aligned).
    """
    if B <= 8:
        return 8, 8
    if B <= 128:
        Bp = -(-B // 8) * 8
        return Bp, Bp
    Bp = -(-B // 128) * 128
    return Bp, 128


def make_params(key, input_size, num_players, max_age,
                hidden_size=32, embedding_dim=32, age_embedding_dim=16):
    """Deterministic synthetic parameters (same shapes as the PyTorch module)."""
    ks = jax.random.split(key, 12)
    D0 = input_size + embedding_dim + age_embedding_dim
    H = hidden_size

    def init(k, shape, scale=0.1):
        return scale * jax.random.normal(k, shape, jnp.float32)

    return {
        "player_embedding": init(ks[0], (num_players, embedding_dim)),
        "age_embedding": init(ks[1], (max_age, age_embedding_dim)),
        # LSTM layer 0
        "w_ih_l0": init(ks[2], (4 * H, D0)),
        "w_hh_l0": init(ks[3], (4 * H, H)),
        "b_ih_l0": init(ks[4], (4 * H,)),
        "b_hh_l0": init(ks[5], (4 * H,)),
        # LSTM layer 1 (input is layer-0 hidden state)
        "w_ih_l1": init(ks[6], (4 * H, H)),
        "w_hh_l1": init(ks[7], (4 * H, H)),
        "b_ih_l1": init(ks[8], (4 * H,)),
        "b_hh_l1": init(ks[9], (4 * H,)),
        # output_layer: Linear(H, 1)
        "w_out": init(ks[10], (1, H)),
        "b_out": init(ks[11], (1,)),
    }


@functools.partial(jax.jit, static_argnames=("hidden_size",))
def nba_projection_forward(params, x, player_idx, age, hidden_size=32):
    """Forward pass matching NBAProjectionModel.forward (inference)."""
    B, S, input_size = x.shape
    H = hidden_size
    perm = _gate_perm(H)

    # --- batch padding (ragged/small batches) -------------------------------
    Bp, tb = _batch_tiling(B)
    if Bp != B:
        pad = Bp - B
        x = jnp.pad(x, ((0, pad), (0, 0), (0, 0)))
        player_idx = jnp.pad(player_idx, (0, pad))   # index 0 is a valid row
        age = jnp.pad(age, (0, pad))

    # --- glue: embedding gathers (plain JAX) --------------------------------
    player_emb = jnp.take(params["player_embedding"], player_idx, axis=0)
    age_emb = jnp.take(params["age_embedding"], age, axis=0)
    combined = jnp.concatenate([player_emb, age_emb], axis=1).astype(jnp.float32)

    # --- hoist the layer-0 input projection out of the recurrence -----------
    # gates0(t) = x_t @ Wih0_x + combined @ Wih0_emb + (b_ih0 + b_hh0) + h0 @ Whh0
    # The first three (time-invariant / non-recurrent) terms are precomputed,
    # gate columns permuted to [i, f, o, g], laid out time-major (S, Bp, 4H).
    wih0_T = params["w_ih_l0"].T.astype(jnp.float32)[:, perm]   # (D0, 4H)
    wih0_x = wih0_T[:input_size]                                # (Din, 4H)
    wih0_e = wih0_T[input_size:]                                # (E+A, 4H)
    b0 = (params["b_ih_l0"] + params["b_hh_l0"])[perm]          # (4H,)
    gate_const0 = combined @ wih0_e + b0                        # (Bp, 4H)
    # TODO(synk): xg0 could be produced/streamed in bf16 to halve HBM->VMEM
    # traffic; kept f32 to preserve the f32 pre-activation numerics.
    xg0 = (jnp.einsum("bsd,dg->sbg", x.astype(jnp.float32), wih0_x)
           + gate_const0[None])                                 # (S, Bp, 4H)

    # Recurrent weights: gate-permuted, transposed, cast once to bf16 for the MXU.
    whh0 = params["w_hh_l0"].T[:, perm].astype(jnp.bfloat16)    # (H, 4H)
    wih1 = params["w_ih_l1"].T[:, perm].astype(jnp.bfloat16)    # (H, 4H)
    whh1 = params["w_hh_l1"].T[:, perm].astype(jnp.bfloat16)    # (H, 4H)
    b1 = (params["b_ih_l1"] + params["b_hh_l1"])[perm][None, :].astype(jnp.float32)
    wout = params["w_out"].astype(jnp.float32)                  # (1, H)
    bout = params["b_out"].astype(jnp.float32)                  # (1,)   SMEM scalar

    nb = Bp // tb

    out_row = pl.pallas_call(
        functools.partial(_lstm_head_kernel, hidden_size=H),
        out_shape=jax.ShapeDtypeStruct((1, Bp), jnp.float32),
        grid_spec=pltpu.PrefetchScalarGridSpec(
            num_scalar_prefetch=0,
            grid=(nb,),
            in_specs=[
                pl.BlockSpec((S, tb, 4 * H), lambda b: (0, b, 0)),   # xg0
                pl.BlockSpec((H, 4 * H), lambda b: (0, 0)),          # whh0
                pl.BlockSpec((H, 4 * H), lambda b: (0, 0)),          # wih1
                pl.BlockSpec((H, 4 * H), lambda b: (0, 0)),          # whh1
                pl.BlockSpec((1, 4 * H), lambda b: (0, 0)),          # b1
                pl.BlockSpec((1, H), lambda b: (0, 0)),              # wout
                pl.BlockSpec(memory_space=pltpu.MemorySpace.SMEM),   # bout scalar
            ],
            out_specs=pl.BlockSpec((1, tb), lambda b: (0, b)),       # lane-dense
        ),
        compiler_params=pltpu.CompilerParams(
            dimension_semantics=("parallel",)),
    )(xg0, whh0, wih1, whh1, b1, wout, bout)

    return out_row[0, :B, None]          # drop padded rows -> (B, 1)


# --------------------------- pure-JAX reference -------------------------------


def reference_forward(params, x, player_idx, age, hidden_size=32):
    B, S, _ = x.shape
    H = hidden_size
    player_emb = jnp.take(params["player_embedding"], player_idx, axis=0)
    age_emb = jnp.take(params["age_embedding"], age, axis=0)
    combined = jnp.concatenate([player_emb, age_emb], axis=1)
    combined = jnp.broadcast_to(combined[:, None, :], (B, S, combined.shape[-1]))
    xe = jnp.concatenate([x, combined], axis=2).astype(jnp.float32)

    def cell(x_t, h, c, wih, whh, bih, bhh):
        gates = x_t @ wih.T + bih + h @ whh.T + bhh
        i_g = jax.nn.sigmoid(gates[:, 0 * H:1 * H])
        f_g = jax.nn.sigmoid(gates[:, 1 * H:2 * H])
        g_g = jnp.tanh(gates[:, 2 * H:3 * H])
        o_g = jax.nn.sigmoid(gates[:, 3 * H:4 * H])
        c_new = f_g * c + i_g * g_g
        return o_g * jnp.tanh(c_new), c_new

    def step(carry, x_t):
        h0, c0, h1, c1 = carry
        h0, c0 = cell(x_t, h0, c0, params["w_ih_l0"], params["w_hh_l0"],
                      params["b_ih_l0"], params["b_hh_l0"])
        h1, c1 = cell(h0, h1, c1, params["w_ih_l1"], params["w_hh_l1"],
                      params["b_ih_l1"], params["b_hh_l1"])
        return (h0, c0, h1, c1), None

    z = jnp.zeros((B, H), jnp.float32)
    (h0, c0, h1, c1), _ = lax.scan(step, (z, z, z, z), jnp.swapaxes(xe, 0, 1))
    return h1 @ params["w_out"].T + params["b_out"]


# ---------------------------------- main --------------------------------------


if __name__ == "__main__":
    # Small config consistent with the module's forward.
    batch, seq, input_size = 2, 8, 8
    num_players, max_age = 10, 50
    hidden_size, embedding_dim, age_embedding_dim = 32, 32, 16

    key = jax.random.PRNGKey(0)
    kp, kx, kpi, ka = jax.random.split(key, 4)

    params = make_params(kp, input_size, num_players, max_age,
                         hidden_size=hidden_size,
                         embedding_dim=embedding_dim,
                         age_embedding_dim=age_embedding_dim)

    x = jax.random.normal(kx, (batch, seq, input_size), jnp.float32)
    player_idx = jax.random.randint(kpi, (batch,), 0, num_players, jnp.int32)
    age = jax.random.randint(ka, (batch,), 0, max_age, jnp.int32)

    out = nba_projection_forward(params, x, player_idx, age, hidden_size=hidden_size)
    out = jax.block_until_ready(out)

    ref = reference_forward(params, x, player_idx, age, hidden_size=hidden_size)
    assert out.shape == (batch, 1)
    # Tolerance accounts for bf16 MXU operands on the recurrent matmuls
    # (accumulation is still f32 via preferred_element_type).
    assert jnp.allclose(out, ref, rtol=2e-2, atol=2e-3), (out, ref)

    print("KERNEL_OK")
</pallas_src>

<mosaic_0001>
module attributes {stable_mosaic.version = 11 : i64} {
  func.func @_lstm_head_kernel(%arg0: i32, %arg1: memref<8x8x128xf32, #tpu.memory_space<vmem>>, %arg2: memref<32x128xbf16, #tpu.memory_space<vmem>>, %arg3: memref<32x128xbf16, #tpu.memory_space<vmem>>, %arg4: memref<32x128xbf16, #tpu.memory_space<vmem>>, %arg5: memref<1x128xf32, #tpu.memory_space<vmem>>, %arg6: memref<1x32xf32, #tpu.memory_space<vmem>>, %arg7: memref<1xf32, #tpu.memory_space<smem>>, %arg8: memref<1x8xf32, #tpu.memory_space<vmem>>) attributes {dimension_semantics = [#tpu.dimension_semantics<parallel>], iteration_bounds = array<i64: 1>, scalar_prefetch = 0 : i64, scratch_operands = 0 : i64, tpu.core_type = #tpu.core_type<tc>, window_params = [{transform_indices = @transform_0, window_bounds = array<i64: 8, 8, 128>}, {pipeline_mode = #tpu.pipeline_mode<synchronous>, transform_indices = @transform_1, window_bounds = array<i64: 32, 128>}, {pipeline_mode = #tpu.pipeline_mode<synchronous>, transform_indices = @transform_2, window_bounds = array<i64: 32, 128>}, {pipeline_mode = #tpu.pipeline_mode<synchronous>, transform_indices = @transform_3, window_bounds = array<i64: 32, 128>}, {pipeline_mode = #tpu.pipeline_mode<synchronous>, transform_indices = @transform_4, window_bounds = array<i64: 1, 128>}, {pipeline_mode = #tpu.pipeline_mode<synchronous>, transform_indices = @transform_5, window_bounds = array<i64: 1, 32>}, {transform_indices = @transform_6, window_bounds = array<i64: 1>}, {transform_indices = @transform_7, window_bounds = array<i64: 1, 8>}]} {
    %c0 = arith.constant 0 : index
    %c0_0 = arith.constant 0 : index
    %0 = vector.load %arg2[%c0, %c0_0] : memref<32x128xbf16, #tpu.memory_space<vmem>>, vector<32x128xbf16>
    %c0_1 = arith.constant 0 : index
    %c0_2 = arith.constant 0 : index
    %1 = vector.load %arg3[%c0_1, %c0_2] : memref<32x128xbf16, #tpu.memory_space<vmem>>, vector<32x128xbf16>
    %c0_3 = arith.constant 0 : index
    %c0_4 = arith.constant 0 : index
    %2 = vector.load %arg4[%c0_3, %c0_4] : memref<32x128xbf16, #tpu.memory_space<vmem>>, vector<32x128xbf16>
    %c0_5 = arith.constant 0 : index
    %3 = memref.load %arg7[%c0_5] : memref<1xf32, #tpu.memory_space<smem>>
    %c0_6 = arith.constant 0 : index
    %c0_7 = arith.constant 0 : index
    %4 = vector.load %arg5[%c0_6, %c0_7] : memref<1x128xf32, #tpu.memory_space<vmem>>, vector<1x128xf32>
    %5 = vector.shape_cast %4 : vector<1x128xf32> to vector<1x128xf32>
    %6 = vector.broadcast %5 : vector<1x128xf32> to vector<8x128xf32>
    %c0_8 = arith.constant 0 : index
    %c0_9 = arith.constant 0 : index
    %c0_10 = arith.constant 0 : index
    %7 = vector.load %arg1[%c0_8, %c0_9, %c0_10] : memref<8x8x128xf32, #tpu.memory_space<vmem>>, vector<1x8x128xf32>
    %8 = vector.shape_cast %7 : vector<1x8x128xf32> to vector<8x128xf32>
    %9 = vector.extract_strided_slice %8 {offsets = [0, 0], sizes = [8, 96], strides = [1, 1]} : vector<8x128xf32> to vector<8x96xf32>
    %10 = arith.negf %9 : vector<8x96xf32>
    %11 = math.exp %10 : vector<8x96xf32>
    %cst = arith.constant 1.000000e+00 : f32
    %12 = vector.broadcast %cst : f32 to vector<8x96xf32>
    %13 = arith.addf %12, %11 : vector<8x96xf32>
    %14 = arith.divf %12, %13 : vector<8x96xf32>
    %15 = vector.extract_strided_slice %8 {offsets = [0, 96], sizes = [8, 32], strides = [1, 1]} : vector<8x128xf32> to vector<8x32xf32>
    %16 = math.tanh %15 : vector<8x32xf32>
    %17 = vector.extract_strided_slice %14 {offsets = [0, 0], sizes = [8, 32], strides = [1, 1]} : vector<8x96xf32> to vector<8x32xf32>
    %18 = arith.mulf %17, %16 : vector<8x32xf32>
    %19 = vector.extract_strided_slice %14 {offsets = [0, 64], sizes = [8, 32], strides = [1, 1]} : vector<8x96xf32> to vector<8x32xf32>
    %20 = math.tanh %18 : vector<8x32xf32>
    %21 = arith.mulf %19, %20 : vector<8x32xf32>
    %22 = arith.truncf %21 : vector<8x32xf32> to vector<8x32xbf16>
    %cst_11 = arith.constant dense<0.000000e+00> : vector<8x128xf32>
    %23 = tpu.matmul %22, %1, %cst_11 {dimension_numbers = #tpu.dot_dimension_numbers<[1], [0], [0], [1], [0, 0, 1, 1], [], []>} : vector<8x32xbf16>, vector<32x128xbf16>, vector<8x128xf32> -> vector<8x128xf32>
    %24 = arith.addf %23, %6 : vector<8x128xf32>
    %25 = vector.extract_strided_slice %24 {offsets = [0, 0], sizes = [8, 96], strides = [1, 1]} : vector<8x128xf32> to vector<8x96xf32>
    %26 = arith.negf %25 : vector<8x96xf32>
    %27 = math.exp %26 : vector<8x96xf32>
    %cst_12 = arith.constant 1.000000e+00 : f32
    %28 = vector.broadcast %cst_12 : f32 to vector<8x96xf32>
    %29 = arith.addf %28, %27 : vector<8x96xf32>
    %30 = arith.divf %28, %29 : vector<8x96xf32>
    %31 = vector.extract_strided_slice %24 {offsets = [0, 96], sizes = [8, 32], strides = [1, 1]} : vector<8x128xf32> to vector<8x32xf32>
    %32 = math.tanh %31 : vector<8x32xf32>
    %33 = vector.extract_strided_slice %30 {offsets = [0, 0], sizes = [8, 32], strides = [1, 1]} : vector<8x96xf32> to vector<8x32xf32>
    %34 = arith.mulf %33, %32 : vector<8x32xf32>
    %35 = vector.extract_strided_slice %30 {offsets = [0, 64], sizes = [8, 32], strides = [1, 1]} : vector<8x96xf32> to vector<8x32xf32>
    %36 = math.tanh %34 : vector<8x32xf32>
    %37 = arith.mulf %35, %36 : vector<8x32xf32>
    %c1 = arith.constant 1 : index
    %c0_13 = arith.constant 0 : index
    %c0_14 = arith.constant 0 : index
    %38 = vector.load %arg1[%c1, %c0_13, %c0_14] : memref<8x8x128xf32, #tpu.memory_space<vmem>>, vector<1x8x128xf32>
    %39 = vector.shape_cast %38 : vector<1x8x128xf32> to vector<8x128xf32>
    %40 = arith.truncf %21 : vector<8x32xf32> to vector<8x32xbf16>
    %cst_15 = arith.constant dense<0.000000e+00> : vector<8x128xf32>
    %41 = tpu.matmul %40, %0, %cst_15 {dimension_numbers = #tpu.dot_dimension_numbers<[1], [0], [0], [1], [0, 0, 1, 1], [], []>} : vector<8x32xbf16>, vector<32x128xbf16>, vector<8x128xf32> -> vector<8x128xf32>
    %42 = arith.addf %39, %41 : vector<8x128xf32>
    %43 = vector.extract_strided_slice %42 {offsets = [0, 0], sizes = [8, 96], strides = [1, 1]} : vector<8x128xf32> to vector<8x96xf32>
    %44 = arith.negf %43 : vector<8x96xf32>
    %45 = math.exp %44 : vector<8x96xf32>
    %cst_16 = arith.constant 1.000000e+00 : f32
    %46 = vector.broadcast %cst_16 : f32 to vector<8x96xf32>
    %47 = arith.addf %46, %45 : vector<8x96xf32>
    %48 = arith.divf %46, %47 : vector<8x96xf32>
    %49 = vector.extract_strided_slice %42 {offsets = [0, 96], sizes = [8, 32], strides = [1, 1]} : vector<8x128xf32> to vector<8x32xf32>
    %50 = math.tanh %49 : vector<8x32xf32>
    %51 = vector.extract_strided_slice %48 {offsets = [0, 0], sizes = [8, 32], strides = [1, 1]} : vector<8x96xf32> to vector<8x32xf32>
    %52 = arith.mulf %51, %50 : vector<8x32xf32>
    %53 = vector.extract_strided_slice %48 {offsets = [0, 32], sizes = [8, 32], strides = [1, 1]} : vector<8x96xf32> to vector<8x32xf32>
    %54 = arith.mulf %53, %18 : vector<8x32xf32>
    %55 = arith.addf %54, %52 : vector<8x32xf32>
    %56 = vector.extract_strided_slice %48 {offsets = [0, 64], sizes = [8, 32], strides = [1, 1]} : vector<8x96xf32> to vector<8x32xf32>
    %57 = math.tanh %55 : vector<8x32xf32>
    %58 = arith.mulf %56, %57 : vector<8x32xf32>
    %59 = arith.truncf %58 : vector<8x32xf32> to vector<8x32xbf16>
    %cst_17 = arith.constant dense<0.000000e+00> : vector<8x128xf32>
    %60 = tpu.matmul %59, %1, %cst_17 {dimension_numbers = #tpu.dot_dimension_numbers<[1], [0], [0], [1], [0, 0, 1, 1], [], []>} : vector<8x32xbf16>, vector<32x128xbf16>, vector<8x128xf32> -> vector<8x128xf32>
    %61 = arith.truncf %37 : vector<8x32xf32> to vector<8x32xbf16>
    %cst_18 = arith.constant dense<0.000000e+00> : vector<8x128xf32>
    %62 = tpu.matmul %61, %2, %cst_18 {dimension_numbers = #tpu.dot_dimension_numbers<[1], [0], [0], [1], [0, 0, 1, 1], [], []>} : vector<8x32xbf16>, vector<32x128xbf16>, vector<8x128xf32> -> vector<8x128xf32>
    %63 = arith.addf %60, %62 : vector<8x128xf32>
    %64 = arith.addf %63, %6 : vector<8x128xf32>
    %65 = vector.extract_strided_slice %64 {offsets = [0, 0], sizes = [8, 96], strides = [1, 1]} : vector<8x128xf32> to vector<8x96xf32>
    %66 = arith.negf %65 : vector<8x96xf32>
    %67 = math.exp %66 : vector<8x96xf32>
    %cst_19 = arith.constant 1.000000e+00 : f32
    %68 = vector.broadcast %cst_19 : f32 to vector<8x96xf32>
    %69 = arith.addf %68, %67 : vector<8x96xf32>
    %70 = arith.divf %68, %69 : vector<8x96xf32>
    %71 = vector.extract_strided_slice %64 {offsets = [0, 96], sizes = [8, 32], strides = [1, 1]} : vector<8x128xf32> to vector<8x32xf32>
    %72 = math.tanh %71 : vector<8x32xf32>
    %73 = vector.extract_strided_slice %70 {offsets = [0, 0], sizes = [8, 32], strides = [1, 1]} : vector<8x96xf32> to vector<8x32xf32>
    %74 = arith.mulf %73, %72 : vector<8x32xf32>
    %75 = vector.extract_strided_slice %70 {offsets = [0, 32], sizes = [8, 32], strides = [1, 1]} : vector<8x96xf32> to vector<8x32xf32>
    %76 = arith.mulf %75, %34 : vector<8x32xf32>
    %77 = arith.addf %76, %74 : vector<8x32xf32>
    %78 = vector.extract_strided_slice %70 {offsets = [0, 64], sizes = [8, 32], strides = [1, 1]} : vector<8x96xf32> to vector<8x32xf32>
    %79 = math.tanh %77 : vector<8x32xf32>
    %80 = arith.mulf %78, %79 : vector<8x32xf32>
    %c2 = arith.constant 2 : index
    %c0_20 = arith.constant 0 : index
    %c0_21 = arith.constant 0 : index
    %81 = vector.load %arg1[%c2, %c0_20, %c0_21] : memref<8x8x128xf32, #tpu.memory_space<vmem>>, vector<1x8x128xf32>
    %82 = vector.shape_cast %81 : vector<1x8x128xf32> to vector<8x128xf32>
    %83 = arith.truncf %58 : vector<8x32xf32> to vector<8x32xbf16>
    %cst_22 = arith.constant dense<0.000000e+00> : vector<8x128xf32>
    %84 = tpu.matmul %83, %0, %cst_22 {dimension_numbers = #tpu.dot_dimension_numbers<[1], [0], [0], [1], [0, 0, 1, 1], [], []>} : vector<8x32xbf16>, vector<32x128xbf16>, vector<8x128xf32> -> vector<8x128xf32>
    %85 = arith.addf %82, %84 : vector<8x128xf32>
    %86 = vector.extract_strided_slice %85 {offsets = [0, 0], sizes = [8, 96], strides = [1, 1]} : vector<8x128xf32> to vector<8x96xf32>
    %87 = arith.negf %86 : vector<8x96xf32>
    %88 = math.exp %87 : vector<8x96xf32>
    %cst_23 = arith.constant 1.000000e+00 : f32
    %89 = vector.broadcast %cst_23 : f32 to vector<8x96xf32>
    %90 = arith.addf %89, %88 : vector<8x96xf32>
    %91 = arith.divf %89, %90 : vector<8x96xf32>
    %92 = vector.extract_strided_slice %85 {offsets = [0, 96], sizes = [8, 32], strides = [1, 1]} : vector<8x128xf32> to vector<8x32xf32>
    %93 = math.tanh %92 : vector<8x32xf32>
    %94 = vector.extract_strided_slice %91 {offsets = [0, 0], sizes = [8, 32], strides = [1, 1]} : vector<8x96xf32> to vector<8x32xf32>
    %95 = arith.mulf %94, %93 : vector<8x32xf32>
    %96 = vector.extract_strided_slice %91 {offsets = [0, 32], sizes = [8, 32], strides = [1, 1]} : vector<8x96xf32> to vector<8x32xf32>
    %97 = arith.mulf %96, %55 : vector<8x32xf32>
    %98 = arith.addf %97, %95 : vector<8x32xf32>
    %99 = vector.extract_strided_slice %91 {offsets = [0, 64], sizes = [8, 32], strides = [1, 1]} : vector<8x96xf32> to vector<8x32xf32>
    %100 = math.tanh %98 : vector<8x32xf32>
    %101 = arith.mulf %99, %100 : vector<8x32xf32>
    %102 = arith.truncf %101 : vector<8x32xf32> to vector<8x32xbf16>
    %cst_24 = arith.constant dense<0.000000e+00> : vector<8x128xf32>
    %103 = tpu.matmul %102, %1, %cst_24 {dimension_numbers = #tpu.dot_dimension_numbers<[1], [0], [0], [1], [0, 0, 1, 1], [], []>} : vector<8x32xbf16>, vector<32x128xbf16>, vector<8x128xf32> -> vector<8x128xf32>
    %104 = arith.truncf %80 : vector<8x32xf32> to vector<8x32xbf16>
    %cst_25 = arith.constant dense<0.000000e+00> : vector<8x128xf32>
    %105 = tpu.matmul %104, %2, %cst_25 {dimension_numbers = #tpu.dot_dimension_numbers<[1], [0], [0], [1], [0, 0, 1, 1], [], []>} : vector<8x32xbf16>, vector<32x128xbf16>, vector<8x128xf32> -> vector<8x128xf32>
    %106 = arith.addf %103, %105 : vector<8x128xf32>
    %107 = arith.addf %106, %6 : vector<8x128xf32>
    %108 = vector.extract_strided_slice %107 {offsets = [0, 0], sizes = [8, 96], strides = [1, 1]} : vector<8x128xf32> to vector<8x96xf32>
    %109 = arith.negf %108 : vector<8x96xf32>
    %110 = math.exp %109 : vector<8x96xf32>
    %cst_26 = arith.constant 1.000000e+00 : f32
    %111 = vector.broadcast %cst_26 : f32 to vector<8x96xf32>
    %112 = arith.addf %111, %110 : vector<8x96xf32>
    %113 = arith.divf %111, %112 : vector<8x96xf32>
    %114 = vector.extract_strided_slice %107 {offsets = [0, 96], sizes = [8, 32], strides = [1, 1]} : vector<8x128xf32> to vector<8x32xf32>
    %115 = math.tanh %114 : vector<8x32xf32>
    %116 = vector.extract_strided_slice %113 {offsets = [0, 0], sizes = [8, 32], strides = [1, 1]} : vector<8x96xf32> to vector<8x32xf32>
    %117 = arith.mulf %116, %115 : vector<8x32xf32>
    %118 = vector.extract_strided_slice %113 {offsets = [0, 32], sizes = [8, 32], strides = [1, 1]} : vector<8x96xf32> to vector<8x32xf32>
    %119 = arith.mulf %118, %77 : vector<8x32xf32>
    %120 = arith.addf %119, %117 : vector<8x32xf32>
    %121 = vector.extract_strided_slice %113 {offsets = [0, 64], sizes = [8, 32], strides = [1, 1]} : vector<8x96xf32> to vector<8x32xf32>
    %122 = math.tanh %120 : vector<8x32xf32>
    %123 = arith.mulf %121, %122 : vector<8x32xf32>
    %c3 = arith.constant 3 : index
    %c0_27 = arith.constant 0 : index
    %c0_28 = arith.constant 0 : index
    %124 = vector.load %arg1[%c3, %c0_27, %c0_28] : memref<8x8x128xf32, #tpu.memory_space<vmem>>, vector<1x8x128xf32>
    %125 = vector.shape_cast %124 : vector<1x8x128xf32> to vector<8x128xf32>
    %126 = arith.truncf %101 : vector<8x32xf32> to vector<8x32xbf16>
    %cst_29 = arith.constant dense<0.000000e+00> : vector<8x128xf32>
    %127 = tpu.matmul %126, %0, %cst_29 {dimension_numbers = #tpu.dot_dimension_numbers<[1], [0], [0], [1], [0, 0, 1, 1], [], []>} : vector<8x32xbf16>, vector<32x128xbf16>, vector<8x128xf32> -> vector<8x128xf32>
    %128 = arith.addf %125, %127 : vector<8x128xf32>
    %129 = vector.extract_strided_slice %128 {offsets = [0, 0], sizes = [8, 96], strides = [1, 1]} : vector<8x128xf32> to vector<8x96xf32>
    %130 = arith.negf %129 : vector<8x96xf32>
    %131 = math.exp %130 : vector<8x96xf32>
    %cst_30 = arith.constant 1.000000e+00 : f32
    %132 = vector.broadcast %cst_30 : f32 to vector<8x96xf32>
    %133 = arith.addf %132, %131 : vector<8x96xf32>
    %134 = arith.divf %132, %133 : vector<8x96xf32>
    %135 = vector.extract_strided_slice %128 {offsets = [0, 96], sizes = [8, 32], strides = [1, 1]} : vector<8x128xf32> to vector<8x32xf32>
    %136 = math.tanh %135 : vector<8x32xf32>
    %137 = vector.extract_strided_slice %134 {offsets = [0, 0], sizes = [8, 32], strides = [1, 1]} : vector<8x96xf32> to vector<8x32xf32>
    %138 = arith.mulf %137, %136 : vector<8x32xf32>
    %139 = vector.extract_strided_slice %134 {offsets = [0, 32], sizes = [8, 32], strides = [1, 1]} : vector<8x96xf32> to vector<8x32xf32>
    %140 = arith.mulf %139, %98 : vector<8x32xf32>
    %141 = arith.addf %140, %138 : vector<8x32xf32>
    %142 = vector.extract_strided_slice %134 {offsets = [0, 64], sizes = [8, 32], strides = [1, 1]} : vector<8x96xf32> to vector<8x32xf32>
    %143 = math.tanh %141 : vector<8x32xf32>
    %144 = arith.mulf %142, %143 : vector<8x32xf32>
    %145 = arith.truncf %144 : vector<8x32xf32> to vector<8x32xbf16>
    %cst_31 = arith.constant dense<0.000000e+00> : vector<8x128xf32>
    %146 = tpu.matmul %145, %1, %cst_31 {dimension_numbers = #tpu.dot_dimension_numbers<[1], [0], [0], [1], [0, 0, 1, 1], [], []>} : vector<8x32xbf16>, vector<32x128xbf16>, vector<8x128xf32> -> vector<8x128xf32>
    %147 = arith.truncf %123 : vector<8x32xf32> to vector<8x32xbf16>
    %cst_32 = arith.constant dense<0.000000e+00> : vector<8x128xf32>
    %148 = tpu.matmul %147, %2, %cst_32 {dimension_numbers = #tpu.dot_dimension_numbers<[1], [0], [0], [1], [0, 0, 1, 1], [], []>} : vector<8x32xbf16>, vector<32x128xbf16>, vector<8x128xf32> -> vector<8x128xf32>
    %149 = arith.addf %146, %148 : vector<8x128xf32>
    %150 = arith.addf %149, %6 : vector<8x128xf32>
    %151 = vector.extract_strided_slice %150 {offsets = [0, 0], sizes = [8, 96], strides = [1, 1]} : vector<8x128xf32> to vector<8x96xf32>
    %152 = arith.negf %151 : vector<8x96xf32>
    %153 = math.exp %152 : vector<8x96xf32>
    %cst_33 = arith.constant 1.000000e+00 : f32
    %154 = vector.broadcast %cst_33 : f32 to vector<8x96xf32>
    %155 = arith.addf %154, %153 : vector<8x96xf32>
    %156 = arith.divf %154, %155 : vector<8x96xf32>
    %157 = vector.extract_strided_slice %150 {offsets = [0, 96], sizes = [8, 32], strides = [1, 1]} : vector<8x128xf32> to vector<8x32xf32>
    %158 = math.tanh %157 : vector<8x32xf32>
    %159 = vector.extract_strided_slice %156 {offsets = [0, 0], sizes = [8, 32], strides = [1, 1]} : vector<8x96xf32> to vector<8x32xf32>
    %160 = arith.mulf %159, %158 : vector<8x32xf32>
    %161 = vector.extract_strided_slice %156 {offsets = [0, 32], sizes = [8, 32], strides = [1, 1]} : vector<8x96xf32> to vector<8x32xf32>
    %162 = arith.mulf %161, %120 : vector<8x32xf32>
    %163 = arith.addf %162, %160 : vector<8x32xf32>
    %164 = vector.extract_strided_slice %156 {offsets = [0, 64], sizes = [8, 32], strides = [1, 1]} : vector<8x96xf32> to vector<8x32xf32>
    %165 = math.tanh %163 : vector<8x32xf32>
    %166 = arith.mulf %164, %165 : vector<8x32xf32>
    %c4 = arith.constant 4 : index
    %c0_34 = arith.constant 0 : index
    %c0_35 = arith.constant 0 : index
    %167 = vector.load %arg1[%c4, %c0_34, %c0_35] : memref<8x8x128xf32, #tpu.memory_space<vmem>>, vector<1x8x128xf32>
    %168 = vector.shape_cast %167 : vector<1x8x128xf32> to vector<8x128xf32>
    %169 = arith.truncf %144 : vector<8x32xf32> to vector<8x32xbf16>
    %cst_36 = arith.constant dense<0.000000e+00> : vector<8x128xf32>
    %170 = tpu.matmul %169, %0, %cst_36 {dimension_numbers = #tpu.dot_dimension_numbers<[1], [0], [0], [1], [0, 0, 1, 1], [], []>} : vector<8x32xbf16>, vector<32x128xbf16>, vector<8x128xf32> -> vector<8x128xf32>
    %171 = arith.addf %168, %170 : vector<8x128xf32>
    %172 = vector.extract_strided_slice %171 {offsets = [0, 0], sizes = [8, 96], strides = [1, 1]} : vector<8x128xf32> to vector<8x96xf32>
    %173 = arith.negf %172 : vector<8x96xf32>
    %174 = math.exp %173 : vector<8x96xf32>
    %cst_37 = arith.constant 1.000000e+00 : f32
    %175 = vector.broadcast %cst_37 : f32 to vector<8x96xf32>
    %176 = arith.addf %175, %174 : vector<8x96xf32>
    %177 = arith.divf %175, %176 : vector<8x96xf32>
    %178 = vector.extract_strided_slice %171 {offsets = [0, 96], sizes = [8, 32], strides = [1, 1]} : vector<8x128xf32> to vector<8x32xf32>
    %179 = math.tanh %178 : vector<8x32xf32>
    %180 = vector.extract_strided_slice %177 {offsets = [0, 0], sizes = [8, 32], strides = [1, 1]} : vector<8x96xf32> to vector<8x32xf32>
    %181 = arith.mulf %180, %179 : vector<8x32xf32>
    %182 = vector.extract_strided_slice %177 {offsets = [0, 32], sizes = [8, 32], strides = [1, 1]} : vector<8x96xf32> to vector<8x32xf32>
    %183 = arith.mulf %182, %141 : vector<8x32xf32>
    %184 = arith.addf %183, %181 : vector<8x32xf32>
    %185 = vector.extract_strided_slice %177 {offsets = [0, 64], sizes = [8, 32], strides = [1, 1]} : vector<8x96xf32> to vector<8x32xf32>
    %186 = math.tanh %184 : vector<8x32xf32>
    %187 = arith.mulf %185, %186 : vector<8x32xf32>
    %188 = arith.truncf %187 : vector<8x32xf32> to vector<8x32xbf16>
    %cst_38 = arith.constant dense<0.000000e+00> : vector<8x128xf32>
    %189 = tpu.matmul %188, %1, %cst_38 {dimension_numbers = #tpu.dot_dimension_numbers<[1], [0], [0], [1], [0, 0, 1, 1], [], []>} : vector<8x32xbf16>, vector<32x128xbf16>, vector<8x128xf32> -> vector<8x128xf32>
    %190 = arith.truncf %166 : vector<8x32xf32> to vector<8x32xbf16>
    %cst_39 = arith.constant dense<0.000000e+00> : vector<8x128xf32>
    %191 = tpu.matmul %190, %2, %cst_39 {dimension_numbers = #tpu.dot_dimension_numbers<[1], [0], [0], [1], [0, 0, 1, 1], [], []>} : vector<8x32xbf16>, vector<32x128xbf16>, vector<8x128xf32> -> vector<8x128xf32>
    %192 = arith.addf %189, %191 : vector<8x128xf32>
    %193 = arith.addf %192, %6 : vector<8x128xf32>
    %194 = vector.extract_strided_slice %193 {offsets = [0, 0], sizes = [8, 96], strides = [1, 1]} : vector<8x128xf32> to vector<8x96xf32>
    %195 = arith.negf %194 : vector<8x96xf32>
    %196 = math.exp %195 : vector<8x96xf32>
    %cst_40 = arith.constant 1.000000e+00 : f32
    %197 = vector.broadcast %cst_40 : f32 to vector<8x96xf32>
    %198 = arith.addf %197, %196 : vector<8x96xf32>
    %199 = arith.divf %197, %198 : vector<8x96xf32>
    %200 = vector.extract_strided_slice %193 {offsets = [0, 96], sizes = [8, 32], strides = [1, 1]} : vector<8x128xf32> to vector<8x32xf32>
    %201 = math.tanh %200 : vector<8x32xf32>
    %202 = vector.extract_strided_slice %199 {offsets = [0, 0], sizes = [8, 32], strides = [1, 1]} : vector<8x96xf32> to vector<8x32xf32>
    %203 = arith.mulf %202, %201 : vector<8x32xf32>
    %204 = vector.extract_strided_slice %199 {offsets = [0, 32], sizes = [8, 32], strides = [1, 1]} : vector<8x96xf32> to vector<8x32xf32>
    %205 = arith.mulf %204, %163 : vector<8x32xf32>
    %206 = arith.addf %205, %203 : vector<8x32xf32>
    %207 = vector.extract_strided_slice %199 {offsets = [0, 64], sizes = [8, 32], strides = [1, 1]} : vector<8x96xf32> to vector<8x32xf32>
    %208 = math.tanh %206 : vector<8x32xf32>
    %209 = arith.mulf %207, %208 : vector<8x32xf32>
    %c5 = arith.constant 5 : index
    %c0_41 = arith.constant 0 : index
    %c0_42 = arith.constant 0 : index
    %210 = vector.load %arg1[%c5, %c0_41, %c0_42] : memref<8x8x128xf32, #tpu.memory_space<vmem>>, vector<1x8x128xf32>
    %211 = vector.shape_cast %210 : vector<1x8x128xf32> to vector<8x128xf32>
    %212 = arith.truncf %187 : vector<8x32xf32> to vector<8x32xbf16>
    %cst_43 = arith.constant dense<0.000000e+00> : vector<8x128xf32>
    %213 = tpu.matmul %212, %0, %cst_43 {dimension_numbers = #tpu.dot_dimension_numbers<[1], [0], [0], [1], [0, 0, 1, 1], [], []>} : vector<8x32xbf16>, vector<32x128xbf16>, vector<8x128xf32> -> vector<8x128xf32>
    %214 = arith.addf %211, %213 : vector<8x128xf32>
    %215 = vector.extract_strided_slice %214 {offsets = [0, 0], sizes = [8, 96], strides = [1, 1]} : vector<8x128xf32> to vector<8x96xf32>
    %216 = arith.negf %215 : vector<8x96xf32>
    %217 = math.exp %216 : vector<8x96xf32>
    %cst_44 = arith.constant 1.000000e+00 : f32
    %218 = vector.broadcast %cst_44 : f32 to vector<8x96xf32>
    %219 = arith.addf %218, %217 : vector<8x96xf32>
    %220 = arith.divf %218, %219 : vector<8x96xf32>
    %221 = vector.extract_strided_slice %214 {offsets = [0, 96], sizes = [8, 32], strides = [1, 1]} : vector<8x128xf32> to vector<8x32xf32>
    %222 = math.tanh %221 : vector<8x32xf32>
    %223 = vector.extract_strided_slice %220 {offsets = [0, 0], sizes = [8, 32], strides = [1, 1]} : vector<8x96xf32> to vector<8x32xf32>
    %224 = arith.mulf %223, %222 : vector<8x32xf32>
    %225 = vector.extract_strided_slice %220 {offsets = [0, 32], sizes = [8, 32], strides = [1, 1]} : vector<8x96xf32> to vector<8x32xf32>
    %226 = arith.mulf %225, %184 : vector<8x32xf32>
    %227 = arith.addf %226, %224 : vector<8x32xf32>
    %228 = vector.extract_strided_slice %220 {offsets = [0, 64], sizes = [8, 32], strides = [1, 1]} : vector<8x96xf32> to vector<8x32xf32>
    %229 = math.tanh %227 : vector<8x32xf32>
    %230 = arith.mulf %228, %229 : vector<8x32xf32>
    %231 = arith.truncf %230 : vector<8x32xf32> to vector<8x32xbf16>
    %cst_45 = arith.constant dense<0.000000e+00> : vector<8x128xf32>
    %232 = tpu.matmul %231, %1, %cst_45 {dimension_numbers = #tpu.dot_dimension_numbers<[1], [0], [0], [1], [0, 0, 1, 1], [], []>} : vector<8x32xbf16>, vector<32x128xbf16>, vector<8x128xf32> -> vector<8x128xf32>
    %233 = arith.truncf %209 : vector<8x32xf32> to vector<8x32xbf16>
    %cst_46 = arith.constant dense<0.000000e+00> : vector<8x128xf32>
    %234 = tpu.matmul %233, %2, %cst_46 {dimension_numbers = #tpu.dot_dimension_numbers<[1], [0], [0], [1], [0, 0, 1, 1], [], []>} : vector<8x32xbf16>, vector<32x128xbf16>, vector<8x128xf32> -> vector<8x128xf32>
    %235 = arith.addf %232, %234 : vector<8x128xf32>
    %236 = arith.addf %235, %6 : vector<8x128xf32>
    %237 = vector.extract_strided_slice %236 {offsets = [0, 0], sizes = [8, 96], strides = [1, 1]} : vector<8x128xf32> to vector<8x96xf32>
    %238 = arith.negf %237 : vector<8x96xf32>
    %239 = math.exp %238 : vector<8x96xf32>
    %cst_47 = arith.constant 1.000000e+00 : f32
    %240 = vector.broadcast %cst_47 : f32 to vector<8x96xf32>
    %241 = arith.addf %240, %239 : vector<8x96xf32>
    %242 = arith.divf %240, %241 : vector<8x96xf32>
    %243 = vector.extract_strided_slice %236 {offsets = [0, 96], sizes = [8, 32], strides = [1, 1]} : vector<8x128xf32> to vector<8x32xf32>
    %244 = math.tanh %243 : vector<8x32xf32>
    %245 = vector.extract_strided_slice %242 {offsets = [0, 0], sizes = [8, 32], strides = [1, 1]} : vector<8x96xf32> to vector<8x32xf32>
    %246 = arith.mulf %245, %244 : vector<8x32xf32>
    %247 = vector.extract_strided_slice %242 {offsets = [0, 32], sizes = [8, 32], strides = [1, 1]} : vector<8x96xf32> to vector<8x32xf32>
    %248 = arith.mulf %247, %206 : vector<8x32xf32>
    %249 = arith.addf %248, %246 : vector<8x32xf32>
    %250 = vector.extract_strided_slice %242 {offsets = [0, 64], sizes = [8, 32], strides = [1, 1]} : vector<8x96xf32> to vector<8x32xf32>
    %251 = math.tanh %249 : vector<8x32xf32>
    %252 = arith.mulf %250, %251 : vector<8x32xf32>
    %c6 = arith.constant 6 : index
    %c0_48 = arith.constant 0 : index
    %c0_49 = arith.constant 0 : index
    %253 = vector.load %arg1[%c6, %c0_48, %c0_49] : memref<8x8x128xf32, #tpu.memory_space<vmem>>, vector<1x8x128xf32>
    %254 = vector.shape_cast %253 : vector<1x8x128xf32> to vector<8x128xf32>
    %255 = arith.truncf %230 : vector<8x32xf32> to vector<8x32xbf16>
    %cst_50 = arith.constant dense<0.000000e+00> : vector<8x128xf32>
    %256 = tpu.matmul %255, %0, %cst_50 {dimension_numbers = #tpu.dot_dimension_numbers<[1], [0], [0], [1], [0, 0, 1, 1], [], []>} : vector<8x32xbf16>, vector<32x128xbf16>, vector<8x128xf32> -> vector<8x128xf32>
    %257 = arith.addf %254, %256 : vector<8x128xf32>
    %258 = vector.extract_strided_slice %257 {offsets = [0, 0], sizes = [8, 96], strides = [1, 1]} : vector<8x128xf32> to vector<8x96xf32>
    %259 = arith.negf %258 : vector<8x96xf32>
    %260 = math.exp %259 : vector<8x96xf32>
    %cst_51 = arith.constant 1.000000e+00 : f32
    %261 = vector.broadcast %cst_51 : f32 to vector<8x96xf32>
    %262 = arith.addf %261, %260 : vector<8x96xf32>
    %263 = arith.divf %261, %262 : vector<8x96xf32>
    %264 = vector.extract_strided_slice %257 {offsets = [0, 96], sizes = [8, 32], strides = [1, 1]} : vector<8x128xf32> to vector<8x32xf32>
    %265 = math.tanh %264 : vector<8x32xf32>
    %266 = vector.extract_strided_slice %263 {offsets = [0, 0], sizes = [8, 32], strides = [1, 1]} : vector<8x96xf32> to vector<8x32xf32>
    %267 = arith.mulf %266, %265 : vector<8x32xf32>
    %268 = vector.extract_strided_slice %263 {offsets = [0, 32], sizes = [8, 32], strides = [1, 1]} : vector<8x96xf32> to vector<8x32xf32>
    %269 = arith.mulf %268, %227 : vector<8x32xf32>
    %270 = arith.addf %269, %267 : vector<8x32xf32>
    %271 = vector.extract_strided_slice %263 {offsets = [0, 64], sizes = [8, 32], strides = [1, 1]} : vector<8x96xf32> to vector<8x32xf32>
    %272 = math.tanh %270 : vector<8x32xf32>
    %273 = arith.mulf %271, %272 : vector<8x32xf32>
    %274 = arith.truncf %273 : vector<8x32xf32> to vector<8x32xbf16>
    %cst_52 = arith.constant dense<0.000000e+00> : vector<8x128xf32>
    %275 = tpu.matmul %274, %1, %cst_52 {dimension_numbers = #tpu.dot_dimension_numbers<[1], [0], [0], [1], [0, 0, 1, 1], [], []>} : vector<8x32xbf16>, vector<32x128xbf16>, vector<8x128xf32> -> vector<8x128xf32>
    %276 = arith.truncf %252 : vector<8x32xf32> to vector<8x32xbf16>
    %cst_53 = arith.constant dense<0.000000e+00> : vector<8x128xf32>
    %277 = tpu.matmul %276, %2, %cst_53 {dimension_numbers = #tpu.dot_dimension_numbers<[1], [0], [0], [1], [0, 0, 1, 1], [], []>} : vector<8x32xbf16>, vector<32x128xbf16>, vector<8x128xf32> -> vector<8x128xf32>
    %278 = arith.addf %275, %277 : vector<8x128xf32>
    %279 = arith.addf %278, %6 : vector<8x128xf32>
    %280 = vector.extract_strided_slice %279 {offsets = [0, 0], sizes = [8, 96], strides = [1, 1]} : vector<8x128xf32> to vector<8x96xf32>
    %281 = arith.negf %280 : vector<8x96xf32>
    %282 = math.exp %281 : vector<8x96xf32>
    %cst_54 = arith.constant 1.000000e+00 : f32
    %283 = vector.broadcast %cst_54 : f32 to vector<8x96xf32>
    %284 = arith.addf %283, %282 : vector<8x96xf32>
    %285 = arith.divf %283, %284 : vector<8x96xf32>
    %286 = vector.extract_strided_slice %279 {offsets = [0, 96], sizes = [8, 32], strides = [1, 1]} : vector<8x128xf32> to vector<8x32xf32>
    %287 = math.tanh %286 : vector<8x32xf32>
    %288 = vector.extract_strided_slice %285 {offsets = [0, 0], sizes = [8, 32], strides = [1, 1]} : vector<8x96xf32> to vector<8x32xf32>
    %289 = arith.mulf %288, %287 : vector<8x32xf32>
    %290 = vector.extract_strided_slice %285 {offsets = [0, 32], sizes = [8, 32], strides = [1, 1]} : vector<8x96xf32> to vector<8x32xf32>
    %291 = arith.mulf %290, %249 : vector<8x32xf32>
    %292 = arith.addf %291, %289 : vector<8x32xf32>
    %293 = vector.extract_strided_slice %285 {offsets = [0, 64], sizes = [8, 32], strides = [1, 1]} : vector<8x96xf32> to vector<8x32xf32>
    %294 = math.tanh %292 : vector<8x32xf32>
    %295 = arith.mulf %293, %294 : vector<8x32xf32>
    %c7 = arith.constant 7 : index
    %c0_55 = arith.constant 0 : index
    %c0_56 = arith.constant 0 : index
    %296 = vector.load %arg1[%c7, %c0_55, %c0_56] : memref<8x8x128xf32, #tpu.memory_space<vmem>>, vector<1x8x128xf32>
    %297 = vector.shape_cast %296 : vector<1x8x128xf32> to vector<8x128xf32>
    %298 = arith.truncf %273 : vector<8x32xf32> to vector<8x32xbf16>
    %cst_57 = arith.constant dense<0.000000e+00> : vector<8x128xf32>
    %299 = tpu.matmul %298, %0, %cst_57 {dimension_numbers = #tpu.dot_dimension_numbers<[1], [0], [0], [1], [0, 0, 1, 1], [], []>} : vector<8x32xbf16>, vector<32x128xbf16>, vector<8x128xf32> -> vector<8x128xf32>
    %300 = arith.addf %297, %299 : vector<8x128xf32>
    %301 = vector.extract_strided_slice %300 {offsets = [0, 0], sizes = [8, 96], strides = [1, 1]} : vector<8x128xf32> to vector<8x96xf32>
    %302 = arith.negf %301 : vector<8x96xf32>
    %303 = math.exp %302 : vector<8x96xf32>
    %cst_58 = arith.constant 1.000000e+00 : f32
    %304 = vector.broadcast %cst_58 : f32 to vector<8x96xf32>
    %305 = arith.addf %304, %303 : vector<8x96xf32>
    %306 = arith.divf %304, %305 : vector<8x96xf32>
    %307 = vector.extract_strided_slice %300 {offsets = [0, 96], sizes = [8, 32], strides = [1, 1]} : vector<8x128xf32> to vector<8x32xf32>
    %308 = math.tanh %307 : vector<8x32xf32>
    %309 = vector.extract_strided_slice %306 {offsets = [0, 0], sizes = [8, 32], strides = [1, 1]} : vector<8x96xf32> to vector<8x32xf32>
    %310 = arith.mulf %309, %308 : vector<8x32xf32>
    %311 = vector.extract_strided_slice %306 {offsets = [0, 32], sizes = [8, 32], strides = [1, 1]} : vector<8x96xf32> to vector<8x32xf32>
    %312 = arith.mulf %311, %270 : vector<8x32xf32>
    %313 = arith.addf %312, %310 : vector<8x32xf32>
    %314 = vector.extract_strided_slice %306 {offsets = [0, 64], sizes = [8, 32], strides = [1, 1]} : vector<8x96xf32> to vector<8x32xf32>
    %315 = math.tanh %313 : vector<8x32xf32>
    %316 = arith.mulf %314, %315 : vector<8x32xf32>
    %317 = arith.truncf %316 : vector<8x32xf32> to vector<8x32xbf16>
    %cst_59 = arith.constant dense<0.000000e+00> : vector<8x128xf32>
    %318 = tpu.matmul %317, %1, %cst_59 {dimension_numbers = #tpu.dot_dimension_numbers<[1], [0], [0], [1], [0, 0, 1, 1], [], []>} : vector<8x32xbf16>, vector<32x128xbf16>, vector<8x128xf32> -> vector<8x128xf32>
    %319 = arith.truncf %295 : vector<8x32xf32> to vector<8x32xbf16>
    %cst_60 = arith.constant dense<0.000000e+00> : vector<8x128xf32>
    %320 = tpu.matmul %319, %2, %cst_60 {dimension_numbers = #tpu.dot_dimension_numbers<[1], [0], [0], [1], [0, 0, 1, 1], [], []>} : vector<8x32xbf16>, vector<32x128xbf16>, vector<8x128xf32> -> vector<8x128xf32>
    %321 = arith.addf %318, %320 : vector<8x128xf32>
    %322 = arith.addf %321, %6 : vector<8x128xf32>
    %323 = vector.extract_strided_slice %322 {offsets = [0, 0], sizes = [8, 96], strides = [1, 1]} : vector<8x128xf32> to vector<8x96xf32>
    %324 = arith.negf %323 : vector<8x96xf32>
    %325 = math.exp %324 : vector<8x96xf32>
    %cst_61 = arith.constant 1.000000e+00 : f32
    %326 = vector.broadcast %cst_61 : f32 to vector<8x96xf32>
    %327 = arith.addf %326, %325 : vector<8x96xf32>
    %328 = arith.divf %326, %327 : vector<8x96xf32>
    %329 = vector.extract_strided_slice %322 {offsets = [0, 96], sizes = [8, 32], strides = [1, 1]} : vector<8x128xf32> to vector<8x32xf32>
    %330 = math.tanh %329 : vector<8x32xf32>
    %331 = vector.extract_strided_slice %328 {offsets = [0, 0], sizes = [8, 32], strides = [1, 1]} : vector<8x96xf32> to vector<8x32xf32>
    %332 = arith.mulf %331, %330 : vector<8x32xf32>
    %333 = vector.extract_strided_slice %328 {offsets = [0, 32], sizes = [8, 32], strides = [1, 1]} : vector<8x96xf32> to vector<8x32xf32>
    %334 = arith.mulf %333, %292 : vector<8x32xf32>
    %335 = arith.addf %334, %332 : vector<8x32xf32>
    %336 = vector.extract_strided_slice %328 {offsets = [0, 64], sizes = [8, 32], strides = [1, 1]} : vector<8x96xf32> to vector<8x32xf32>
    %337 = math.tanh %335 : vector<8x32xf32>
    %338 = arith.mulf %336, %337 : vector<8x32xf32>
    %c0_62 = arith.constant 0 : index
    %c0_63 = arith.constant 0 : index
    %339 = vector.load %arg6[%c0_62, %c0_63] : memref<1x32xf32, #tpu.memory_space<vmem>>, vector<1x32xf32>
    %340 = vector.broadcast %339 : vector<1x32xf32> to vector<8x32xf32>
    %341 = arith.mulf %338, %340 : vector<8x32xf32>
    %cst_64 = arith.constant dense<0.000000e+00> : vector<8xf32>
    %342 = vector.multi_reduction <add>, %341, %cst_64 [1] : vector<8x32xf32> to vector<8xf32>
    %343 = vector.shape_cast %342 : vector<8xf32> to vector<8x1xf32>
    %344 = vector.broadcast %3 : f32 to vector<8x1xf32>
    %345 = arith.addf %343, %344 : vector<8x1xf32>
    %346 = tpu.transpose %345, [1, 0] : vector<8x1xf32> -> vector<1x8xf32>
    %c0_65 = arith.constant 0 : index
    %c0_66 = arith.constant 0 : index
    %347 = vector.load %arg8[%c0_65, %c0_66] : memref<1x8xf32, #tpu.memory_space<vmem>>, vector<1x8xf32>
    tpu.vector_store %arg8[%c0_65, %c0_66], %346 {strides = array<i32>} : memref<1x8xf32, #tpu.memory_space<vmem>>, vector<1x8xf32>,
    return
  }
  func.func @transform_0(%arg0: i32) -> (i32, i32, i32) {
    %c0_i32 = arith.constant 0 : i32
    %c0_i32_0 = arith.constant 0 : i32
    %c0_i32_1 = arith.constant 0 : i32
    return %c0_i32, %arg0, %c0_i32_0 : i32, i32, i32
  }
  func.func @transform_1(%arg0: i32) -> (i32, i32) {
    %c0_i32 = arith.constant 0 : i32
    %c0_i32_0 = arith.constant 0 : i32
    %c0_i32_1 = arith.constant 0 : i32
    return %c0_i32, %c0_i32_0 : i32, i32
  }
  func.func @transform_2(%arg0: i32) -> (i32, i32) {
    %c0_i32 = arith.constant 0 : i32
    %c0_i32_0 = arith.constant 0 : i32
    %c0_i32_1 = arith.constant 0 : i32
    return %c0_i32, %c0_i32_0 : i32, i32
  }
  func.func @transform_3(%arg0: i32) -> (i32, i32) {
    %c0_i32 = arith.constant 0 : i32
    %c0_i32_0 = arith.constant 0 : i32
    %c0_i32_1 = arith.constant 0 : i32
    return %c0_i32, %c0_i32_0 : i32, i32
  }
  func.func @transform_4(%arg0: i32) -> (i32, i32) {
    %c0_i32 = arith.constant 0 : i32
    %c0_i32_0 = arith.constant 0 : i32
    %c0_i32_1 = arith.constant 0 : i32
    return %c0_i32, %c0_i32_0 : i32, i32
  }
  func.func @transform_5(%arg0: i32) -> (i32, i32) {
    %c0_i32 = arith.constant 0 : i32
    %c0_i32_0 = arith.constant 0 : i32
    %c0_i32_1 = arith.constant 0 : i32
    return %c0_i32, %c0_i32_0 : i32, i32
  }
  func.func @transform_6(%arg0: i32) -> i32 {
    %c0_i32 = arith.constant 0 : i32
    %c0_i32_0 = arith.constant 0 : i32
    return %c0_i32 : i32
  }
  func.func @transform_7(%arg0: i32) -> (i32, i32) {
    %c0_i32 = arith.constant 0 : i32
    %c0_i32_0 = arith.constant 0 : i32
    return %c0_i32, %arg0 : i32, i32
  }
}

</mosaic_0001>

<llo_original>
// kernel: nba_projection_forward.1
$region0: #{nba_projection_forward.1}
  #allocation0 [shape = 'u32[]', space=smem, size = 0x4, offset = 0x4, fixed_abs, tag = 'smem constant byte address 0x4 - core index']
  #allocation1 [shape = 'u32[72,128]{1,0:T(1,128)}', space=vmem, size = 0x9000, scoped, tag = 'internal scratch']
  #allocation2 [shape = 'f32[1]{0:T(128)S(6)}', space=smem, size = 0x200, scoped, tag = 'scoped memory for nba_projection_forward.1']
  %s0 = inlined_call_operand.vmem [shape: f32[8,8,128], index: 0, kind: input, shape index: {}]
  %s1 = inlined_call_operand.vmem [shape: bf16[32,128], index: 1, kind: input, shape index: {}]
  %s2 = inlined_call_operand.vmem [shape: bf16[32,128], index: 2, kind: input, shape index: {}]
  %s3 = inlined_call_operand.vmem [shape: bf16[32,128], index: 3, kind: input, shape index: {}]
  %s4 = inlined_call_operand.vmem [shape: f32[1,128], index: 4, kind: input, shape index: {}]
  %s5 = inlined_call_operand.vmem [shape: f32[1,32], index: 5, kind: input, shape index: {}]
  %s6 = inlined_call_operand.<no memory space> [shape: f32[1], index: 6, kind: input, shape index: {}]
  %s7 = inlined_call_operand.vmem [shape: f32[1,8], index: 7, kind: output, shape index: {}]
  %s8 = sld [smem:[#allocation0]]
  $region38: #{nba_projection_forward.1} parent=0
    _
  %s10 = ssub.s32 1, %s8
  %s11 = scalar_select 0, %s10, %s8
  %12 = sst [smem:[#allocation2]] %s6
  // Predicated region
  $region2: #{nba_projection_forward.1} parent=0 // pred_check
    _
  $region3: #{nba_projection_forward.1} parent=0 // pred_check_branch
    %14 = sbr.rel (0) target = $region5
  $region4: #{nba_projection_forward.1} parent=0 // pred_region
    _
  $region5: #{nba_projection_forward.1} parent=0 // pred_fallthru
    _
  // Predicated region
  $region6: #{nba_projection_forward.1} parent=0 // pred_check
    _
  $region7: #{nba_projection_forward.1} parent=0 // pred_check_branch
    %16 = sbr.rel (0) target = $region9
  $region8: #{nba_projection_forward.1} parent=0 // pred_region
    _
  $region9: #{nba_projection_forward.1} parent=0 // pred_fallthru
    _
  // Predicated region
  $region10: #{nba_projection_forward.1} parent=0 // pred_check
    _
  $region11: #{nba_projection_forward.1} parent=0 // pred_check_branch
    %18 = sbr.rel (0) target = $region13
  $region12: #{nba_projection_forward.1} parent=0 // pred_region
    _
  $region13: #{nba_projection_forward.1} parent=0 // pred_fallthru
    _
  // Predicated region
  $region14: #{nba_projection_forward.1} parent=0 // pred_check
    _
  $region15: #{nba_projection_forward.1} parent=0 // pred_check_branch
    %20 = sbr.rel (0) target = $region17
  $region16: #{nba_projection_forward.1} parent=0 // pred_region
    _
  $region17: #{nba_projection_forward.1} parent=0 // pred_fallthru
    _
  // Predicated region
  $region18: #{nba_projection_forward.1} parent=0 // pred_check
    _
  $region19: #{nba_projection_forward.1} parent=0 // pred_check_branch
    %22 = sbr.rel (0) target = $region21
  $region20: #{nba_projection_forward.1} parent=0 // pred_region
    _
  $region21: #{nba_projection_forward.1} parent=0 // pred_fallthru
    _
  // Predicated region
  $region22: #{nba_projection_forward.1} parent=0 // pred_check
    _
  $region23: #{nba_projection_forward.1} parent=0 // pred_check_branch
    %24 = sbr.rel (0) target = $region25
  $region24: #{nba_projection_forward.1} parent=0 // pred_region
    _
  $region25: #{nba_projection_forward.1} parent=0 // pred_fallthru
    _
  // Predicated region
  $region26: #{nba_projection_forward.1} parent=0 // pred_check
    _
  $region27: #{nba_projection_forward.1} parent=0 // pred_check_branch
    %26 = sbr.rel (0) target = $region29
  $region28: #{nba_projection_forward.1} parent=0 // pred_region
    _
  $region29: #{nba_projection_forward.1} parent=0 // pred_fallthru
    _
  %v28 = vld [vmem:[%s1] sm:$0xf]
  %v29 = vld [vmem:[%s1 + $0x4] sm:$0xf]
  %v30 = vld [vmem:[%s1 + $0x8] sm:$0xf]
  %v31 = vld [vmem:[%s1 + $0xc] sm:$0xf]
  %v32 = vld [vmem:[%s2] sm:$0xf]
  %v33 = vld [vmem:[%s2 + $0x4] sm:$0xf]
  %v34 = vld [vmem:[%s2 + $0x8] sm:$0xf]
  %v35 = vld [vmem:[%s2 + $0xc] sm:$0xf]
  %v36 = vld [vmem:[%s3] sm:$0xf]
  %v37 = vld [vmem:[%s3 + $0x4] sm:$0xf]
  %v38 = vld [vmem:[%s3 + $0x8] sm:$0xf]
  %v39 = vld [vmem:[%s3 + $0xc] sm:$0xf]
  %s40 = sld [smem:[#allocation2]]
  %v41 = vld [vmem:[%s4] sm:$0x1]
  %v43 = vperm.slane %v41, 0
  %v45 = vld [vmem:[%s0] sm:$0xff]
  %v46 = vxor.u32 %v45, 2147483648
  %v47 = vmul.f32 %v46, 1.442695
  %v48 = vpow.pop %v47
  %v49 = vadd.f32 %v48, 1.0
  %v50 = vrcp.pop %v49
  %v51 = vmul.f32 %v49, %v50
  %v52 = vsub.f32 1.0, %v51
  %v53 = vmul.f32 %v50, %v52
  %v54 = vadd.f32 %v50, %v53
  %vm55 = vweird.f32 %v49
  %vm56 = vweird.f32 %v50
  %vm57 = vmor %vm55, %vm56
  %v58 = vsel %vm57, %v50, %v54
  %v59 = vand.u32 2147483647, %v49
  %vm60 = vcmp.eq.f32.partialorder %v59, 8.507059e+37
  %v61 = vand.u32 %v49, 2147483648
  %v62 = vor.u32 1.1754944e-38, %v61
  %v63 = vsel %vm60, %v62, %v58
  %v64 = vmul.f32 1.0, %v63
  %v65 = vtanh.pop %v45
  %67 = vrot.lane.b32.xlu0 %v65, 32
  %v68 = vpop.permute.xlu0 %67
  %v70 = vmul.f32 %v64, %v68
  %v71 = vtanh.pop %v70
  %73 = vrot.lane.b32.xlu0 %v71, 64
  %v74 = vpop.permute.xlu0 %73
  %v76 = vmul.f32 %v64, %v74
  %v77 = vpack.c.bf16 %v76, %v76
  %79 = vrot.lane.b32.xlu0 %v77, 64
  %v80 = vpop.permute.xlu0 %79
  %v85 = vunpack.c.l.b16 %v32
  %v86 = vunpack.c.l.b16 %v33
  %v87 = vunpack.c.l.b16 %v34
  %v88 = vunpack.c.l.b16 %v35
  %v89 = vpack.c.b16 %v86, %v85
  %v90 = vpack.c.b16 %v88, %v87
  %vm93 = vcmask 261120
  %v95 = vsel %vm93, %v80, 0
  %97 = vmatpush.bf16.msra.mxu0 0
  %98 = vmatpush.bf16.msra.mxu0 0
  %99 = vmatpush.bf16.msra.mxu0 0
  %100 = vmatpush.bf16.msra.mxu0 0
  %101 = vmatpush.bf16.msra.mxu0 0
  %102 = vmatpush.bf16.msra.mxu0 0
  %103 = vmatpush.bf16.msra.mxu0 %v90
  %104 = vmatpush.bf16.msra.mxu0 %v89
  %105 = vmatmul.bf16.gmra.mxu0 %v95
  %v106 = vpop.f32.mrf.mxu0
  %v107 = vadd.f32 %v43, %v106
  %v108 = vpop.f32.mrf.mxu0
  %109 = vdwg.mxu0
  %v110 = vxor.u32 %v107, 2147483648
  %v111 = vmul.f32 %v110, 1.442695
  %v112 = vpow.pop %v111
  %v113 = vadd.f32 %v112, 1.0
  %v114 = vrcp.pop %v113
  %v115 = vmul.f32 %v113, %v114
  %v116 = vsub.f32 1.0, %v115
  %v117 = vmul.f32 %v114, %v116
  %v118 = vadd.f32 %v114, %v117
  %vm119 = vweird.f32 %v113
  %vm120 = vweird.f32 %v114
  %vm121 = vmor %vm119, %vm120
  %v122 = vsel %vm121, %v114, %v118
  %v123 = vand.u32 2147483647, %v113
  %vm124 = vcmp.eq.f32.partialorder %v123, 8.507059e+37
  %v125 = vand.u32 %v113, 2147483648
  %v126 = vor.u32 1.1754944e-38, %v125
  %v127 = vsel %vm124, %v126, %v122
  %v128 = vmul.f32 1.0, %v127
  %v129 = vtanh.pop %v107
  %131 = vrot.lane.b32.xlu0 %v129, 32
  %v132 = vpop.permute.xlu0 %131
  %v134 = vmul.f32 %v128, %v132
  %v135 = vtanh.pop %v134
  %137 = vrot.lane.b32.xlu0 %v135, 64
  %v138 = vpop.permute.xlu0 %137
  %v140 = vmul.f32 %v128, %v138
  %s141 = scalar_lea.vmem %s0, 8
  %v142 = vld [vmem:[%s141] sm:$0xff]
  %v147 = vunpack.c.l.b16 %v28
  %v148 = vunpack.c.l.b16 %v29
  %v149 = vunpack.c.l.b16 %v30
  %v150 = vunpack.c.l.b16 %v31
  %v151 = vpack.c.b16 %v148, %v147
  %v152 = vpack.c.b16 %v150, %v149
  %155 = vmatpush.bf16.msra.mxu0 0
  %156 = vmatpush.bf16.msra.mxu0 0
  %157 = vmatpush.bf16.msra.mxu0 0
  %158 = vmatpush.bf16.msra.mxu0 0
  %159 = vmatpush.bf16.msra.mxu0 0
  %160 = vmatpush.bf16.msra.mxu0 0
  %161 = vmatpush.bf16.msra.mxu0 %v152
  %162 = vmatpush.bf16.msra.mxu0 %v151
  %163 = vmatmul.bf16.gmra.mxu0 %v95
  %v164 = vpop.f32.mrf.mxu0
  %v165 = vadd.f32 0.0, %v164
  %v166 = vpop.f32.mrf.mxu0
  %167 = vdwg.mxu0
  %v168 = vadd.f32 %v142, %v165
  %v169 = vxor.u32 %v168, 2147483648
  %v170 = vmul.f32 %v169, 1.442695
  %v171 = vpow.pop %v170
  %v172 = vadd.f32 %v171, 1.0
  %v173 = vrcp.pop %v172
  %v174 = vmul.f32 %v172, %v173
  %v175 = vsub.f32 1.0, %v174
  %v176 = vmul.f32 %v173, %v175
  %v177 = vadd.f32 %v173, %v176
  %vm178 = vweird.f32 %v172
  %vm179 = vweird.f32 %v173
  %vm180 = vmor %vm178, %vm179
  %v181 = vsel %vm180, %v173, %v177
  %v182 = vand.u32 2147483647, %v172
  %vm183 = vcmp.eq.f32.partialorder %v182, 8.507059e+37
  %v184 = vand.u32 %v172, 2147483648
  %v185 = vor.u32 1.1754944e-38, %v184
  %v186 = vsel %vm183, %v185, %v181
  %v187 = vmul.f32 1.0, %v186
  %v188 = vtanh.pop %v168
  %190 = vrot.lane.b32.xlu0 %v188, 32
  %v191 = vpop.permute.xlu0 %190
  %v193 = vmul.f32 %v187, %v191
  %195 = vrot.lane.b32.xlu0 %v70, 32
  %v196 = vpop.permute.xlu0 %195
  %v198 = vmul.f32 %v187, %v196
  %200 = vrot.lane.b32.xlu0 %v193, 32
  %v201 = vpop.permute.xlu0 %200
  %v203 = vadd.f32 %v198, %v201
  %v204 = vtanh.pop %v203
  %206 = vrot.lane.b32.xlu0 %v204, 32
  %v207 = vpop.permute.xlu0 %206
  %v209 = vmul.f32 %v187, %v207
  %v210 = vpack.c.bf16 %v209, %v209
  %v211 = vpack.c.bf16 %v140, %v140
  %213 = vrot.lane.b32.xlu0 %v211, 64
  %v214 = vpop.permute.xlu0 %213
  %v219 = vunpack.c.l.b16 %v36
  %v220 = vunpack.c.l.b16 %v37
  %v221 = vunpack.c.l.b16 %v38
  %v222 = vunpack.c.l.b16 %v39
  %v223 = vpack.c.b16 %v220, %v219
  %v224 = vpack.c.b16 %v222, %v221
  %v228 = vsel %vm93, %v214, 0
  %230 = vmatpush.bf16.msra.mxu0 0
  %231 = vmatpush.bf16.msra.mxu0 0
  %232 = vmatpush.bf16.msra.mxu0 0
  %233 = vmatpush.bf16.msra.mxu0 0
  %234 = vmatpush.bf16.msra.mxu0 0
  %235 = vmatpush.bf16.msra.mxu0 0
  %236 = vmatpush.bf16.msra.mxu0 %v224
  %237 = vmatpush.bf16.msra.mxu0 %v223
  %238 = vmatmul.bf16.gmra.mxu0 %v228
  %v239 = vpop.f32.mrf.mxu0
  %v240 = vadd.f32 0.0, %v239
  %v241 = vpop.f32.mrf.mxu0
  %242 = vdwg.mxu0
  %244 = vrot.lane.b32.xlu0 %v210, 64
  %v245 = vpop.permute.xlu0 %244
  %v247 = vsel %vm93, %v245, 0
  %249 = vmatpush.bf16.msra.mxu0 0
  %250 = vmatpush.bf16.msra.mxu0 0
  %251 = vmatpush.bf16.msra.mxu0 0
  %252 = vmatpush.bf16.msra.mxu0 0
  %253 = vmatpush.bf16.msra.mxu0 0
  %254 = vmatpush.bf16.msra.mxu0 0
  %255 = vmatpush.bf16.msra.mxu0 %v90
  %256 = vmatpush.bf16.msra.mxu0 %v89
  %257 = vmatmul.bf16.gmra.mxu0 %v247
  %v258 = vpop.f32.mrf.mxu0
  %v259 = vadd.f32 %v240, %v258
  %v260 = vpop.f32.mrf.mxu0
  %261 = vdwg.mxu0
  %v262 = vadd.f32 %v259, %v43
  %v263 = vxor.u32 %v262, 2147483648
  %v264 = vmul.f32 %v263, 1.442695
  %v265 = vpow.pop %v264
  %v266 = vadd.f32 %v265, 1.0
  %v267 = vrcp.pop %v266
  %v268 = vmul.f32 %v266, %v267
  %v269 = vsub.f32 1.0, %v268
  %v270 = vmul.f32 %v267, %v269
  %v271 = vadd.f32 %v267, %v270
  %vm272 = vweird.f32 %v266
  %vm273 = vweird.f32 %v267
  %vm274 = vmor %vm272, %vm273
  %v275 = vsel %vm274, %v267, %v271
  %v276 = vand.u32 2147483647, %v266
  %vm277 = vcmp.eq.f32.partialorder %v276, 8.507059e+37
  %v278 = vand.u32 %v266, 2147483648
  %v279 = vor.u32 1.1754944e-38, %v278
  %v280 = vsel %vm277, %v279, %v275
  %v281 = vmul.f32 1.0, %v280
  %v282 = vtanh.pop %v262
  %284 = vrot.lane.b32.xlu0 %v282, 32
  %v285 = vpop.permute.xlu0 %284
  %v287 = vmul.f32 %v281, %v285
  %289 = vrot.lane.b32.xlu0 %v134, 32
  %v290 = vpop.permute.xlu0 %289
  %v292 = vmul.f32 %v281, %v290
  %294 = vrot.lane.b32.xlu0 %v287, 32
  %v295 = vpop.permute.xlu0 %294
  %v297 = vadd.f32 %v292, %v295
  %v298 = vtanh.pop %v297
  %300 = vrot.lane.b32.xlu0 %v298, 32
  %v301 = vpop.permute.xlu0 %300
  %v303 = vmul.f32 %v281, %v301
  %s304 = scalar_lea.vmem %s0, 16
  %v305 = vld [vmem:[%s304] sm:$0xff]
  %306 = vmatpush.bf16.msra.mxu0 0
  %307 = vmatpush.bf16.msra.mxu0 0
  %308 = vmatpush.bf16.msra.mxu0 0
  %309 = vmatpush.bf16.msra.mxu0 0
  %310 = vmatpush.bf16.msra.mxu0 0
  %311 = vmatpush.bf16.msra.mxu0 0
  %312 = vmatpush.bf16.msra.mxu0 %v152
  %313 = vmatpush.bf16.msra.mxu0 %v151
  %314 = vmatmul.bf16.gmra.mxu0 %v247
  %v315 = vpop.f32.mrf.mxu0
  %v316 = vadd.f32 0.0, %v315
  %v317 = vpop.f32.mrf.mxu0
  %318 = vdwg.mxu0
  %v319 = vadd.f32 %v305, %v316
  %v320 = vxor.u32 %v319, 2147483648
  %v321 = vmul.f32 %v320, 1.442695
  %v322 = vpow.pop %v321
  %v323 = vadd.f32 %v322, 1.0
  %v324 = vrcp.pop %v323
  %v325 = vmul.f32 %v323, %v324
  %v326 = vsub.f32 1.0, %v325
  %v327 = vmul.f32 %v324, %v326
  %v328 = vadd.f32 %v324, %v327
  %vm329 = vweird.f32 %v323
  %vm330 = vweird.f32 %v324
  %vm331 = vmor %vm329, %vm330
  %v332 = vsel %vm331, %v324, %v328
  %v333 = vand.u32 2147483647, %v323
  %vm334 = vcmp.eq.f32.partialorder %v333, 8.507059e+37
  %v335 = vand.u32 %v323, 2147483648
  %v336 = vor.u32 1.1754944e-38, %v335
  %v337 = vsel %vm334, %v336, %v332
  %v338 = vmul.f32 1.0, %v337
  %v339 = vtanh.pop %v319
  %341 = vrot.lane.b32.xlu0 %v339, 32
  %v342 = vpop.permute.xlu0 %341
  %v344 = vmul.f32 %v338, %v342
  %v345 = vmul.f32 %v338, %v203
  %347 = vrot.lane.b32.xlu0 %v344, 32
  %v348 = vpop.permute.xlu0 %347
  %v350 = vadd.f32 %v345, %v348
  %v351 = vtanh.pop %v350
  %353 = vrot.lane.b32.xlu0 %v351, 32
  %v354 = vpop.permute.xlu0 %353
  %v356 = vmul.f32 %v338, %v354
  %v357 = vpack.c.bf16 %v356, %v356
  %v358 = vpack.c.bf16 %v303, %v303
  %360 = vrot.lane.b32.xlu0 %v358, 64
  %v361 = vpop.permute.xlu0 %360
  %v363 = vsel %vm93, %v361, 0
  %365 = vmatpush.bf16.msra.mxu0 0
  %366 = vmatpush.bf16.msra.mxu0 0
  %367 = vmatpush.bf16.msra.mxu0 0
  %368 = vmatpush.bf16.msra.mxu0 0
  %369 = vmatpush.bf16.msra.mxu0 0
  %370 = vmatpush.bf16.msra.mxu0 0
  %371 = vmatpush.bf16.msra.mxu0 %v224
  %372 = vmatpush.bf16.msra.mxu0 %v223
  %373 = vmatmul.bf16.gmra.mxu0 %v363
  %v374 = vpop.f32.mrf.mxu0
  %v375 = vadd.f32 0.0, %v374
  %v376 = vpop.f32.mrf.mxu0
  %377 = vdwg.mxu0
  %379 = vrot.lane.b32.xlu0 %v357, 64
  %v380 = vpop.permute.xlu0 %379
  %v382 = vsel %vm93, %v380, 0
  %384 = vmatpush.bf16.msra.mxu0 0
  %385 = vmatpush.bf16.msra.mxu0 0
  %386 = vmatpush.bf16.msra.mxu0 0
  %387 = vmatpush.bf16.msra.mxu0 0
  %388 = vmatpush.bf16.msra.mxu0 0
  %389 = vmatpush.bf16.msra.mxu0 0
  %390 = vmatpush.bf16.msra.mxu0 %v90
  %391 = vmatpush.bf16.msra.mxu0 %v89
  %392 = vmatmul.bf16.gmra.mxu0 %v382
  %v393 = vpop.f32.mrf.mxu0
  %v394 = vadd.f32 %v375, %v393
  %v395 = vpop.f32.mrf.mxu0
  %396 = vdwg.mxu0
  %v397 = vadd.f32 %v394, %v43
  %v398 = vxor.u32 %v397, 2147483648
  %v399 = vmul.f32 %v398, 1.442695
  %v400 = vpow.pop %v399
  %v401 = vadd.f32 %v400, 1.0
  %v402 = vrcp.pop %v401
  %v403 = vmul.f32 %v401, %v402
  %v404 = vsub.f32 1.0, %v403
  %v405 = vmul.f32 %v402, %v404
  %v406 = vadd.f32 %v402, %v405
  %vm407 = vweird.f32 %v401
  %vm408 = vweird.f32 %v402
  %vm409 = vmor %vm407, %vm408
  %v410 = vsel %vm409, %v402, %v406
  %v411 = vand.u32 2147483647, %v401
  %vm412 = vcmp.eq.f32.partialorder %v411, 8.507059e+37
  %v413 = vand.u32 %v401, 2147483648
  %v414 = vor.u32 1.1754944e-38, %v413
  %v415 = vsel %vm412, %v414, %v410
  %v416 = vmul.f32 1.0, %v415
  %v417 = vtanh.pop %v397
  %419 = vrot.lane.b32.xlu0 %v417, 32
  %v420 = vpop.permute.xlu0 %419
  %v422 = vmul.f32 %v416, %v420
  %v423 = vmul.f32 %v416, %v297
  %425 = vrot.lane.b32.xlu0 %v422, 32
  %v426 = vpop.permute.xlu0 %425
  %v428 = vadd.f32 %v423, %v426
  %v429 = vtanh.pop %v428
  %431 = vrot.lane.b32.xlu0 %v429, 32
  %v432 = vpop.permute.xlu0 %431
  %v434 = vmul.f32 %v416, %v432
  %s435 = scalar_lea.vmem %s0, 24
  %v436 = vld [vmem:[%s435] sm:$0xff]
  %437 = vmatpush.bf16.msra.mxu0 0
  %438 = vmatpush.bf16.msra.mxu0 0
  %439 = vmatpush.bf16.msra.mxu0 0
  %440 = vmatpush.bf16.msra.mxu0 0
  %441 = vmatpush.bf16.msra.mxu0 0
  %442 = vmatpush.bf16.msra.mxu0 0
  %443 = vmatpush.bf16.msra.mxu0 %v152
  %444 = vmatpush.bf16.msra.mxu0 %v151
  %445 = vmatmul.bf16.gmra.mxu0 %v382
  %v446 = vpop.f32.mrf.mxu0
  %v447 = vadd.f32 0.0, %v446
  %v448 = vpop.f32.mrf.mxu0
  %449 = vdwg.mxu0
  %v450 = vadd.f32 %v436, %v447
  %v451 = vxor.u32 %v450, 2147483648
  %v452 = vmul.f32 %v451, 1.442695
  %v453 = vpow.pop %v452
  %v454 = vadd.f32 %v453, 1.0
  %v455 = vrcp.pop %v454
  %v456 = vmul.f32 %v454, %v455
  %v457 = vsub.f32 1.0, %v456
  %v458 = vmul.f32 %v455, %v457
  %v459 = vadd.f32 %v455, %v458
  %vm460 = vweird.f32 %v454
  %vm461 = vweird.f32 %v455
  %vm462 = vmor %vm460, %vm461
  %v463 = vsel %vm462, %v455, %v459
  %v464 = vand.u32 2147483647, %v454
  %vm465 = vcmp.eq.f32.partialorder %v464, 8.507059e+37
  %v466 = vand.u32 %v454, 2147483648
  %v467 = vor.u32 1.1754944e-38, %v466
  %v468 = vsel %vm465, %v467, %v463
  %v469 = vmul.f32 1.0, %v468
  %v470 = vtanh.pop %v450
  %472 = vrot.lane.b32.xlu0 %v470, 32
  %v473 = vpop.permute.xlu0 %472
  %v475 = vmul.f32 %v469, %v473
  %v476 = vmul.f32 %v469, %v350
  %478 = vrot.lane.b32.xlu0 %v475, 32
  %v479 = vpop.permute.xlu0 %478
  %v481 = vadd.f32 %v476, %v479
  %v482 = vtanh.pop %v481
  %484 = vrot.lane.b32.xlu0 %v482, 32
  %v485 = vpop.permute.xlu0 %484
  %v487 = vmul.f32 %v469, %v485
  %v488 = vpack.c.bf16 %v487, %v487
  %v489 = vpack.c.bf16 %v434, %v434
  %491 = vrot.lane.b32.xlu0 %v489, 64
  %v492 = vpop.permute.xlu0 %491
  %v494 = vsel %vm93, %v492, 0
  %496 = vmatpush.bf16.msra.mxu0 0
  %497 = vmatpush.bf16.msra.mxu0 0
  %498 = vmatpush.bf16.msra.mxu0 0
  %499 = vmatpush.bf16.msra.mxu0 0
  %500 = vmatpush.bf16.msra.mxu0 0
  %501 = vmatpush.bf16.msra.mxu0 0
  %502 = vmatpush.bf16.msra.mxu0 %v224
  %503 = vmatpush.bf16.msra.mxu0 %v223
  %504 = vmatmul.bf16.gmra.mxu0 %v494
  %v505 = vpop.f32.mrf.mxu0
  %v506 = vadd.f32 0.0, %v505
  %v507 = vpop.f32.mrf.mxu0
  %508 = vdwg.mxu0
  %510 = vrot.lane.b32.xlu0 %v488, 64
  %v511 = vpop.permute.xlu0 %510
  %v513 = vsel %vm93, %v511, 0
  %515 = vmatpush.bf16.msra.mxu0 0
  %516 = vmatpush.bf16.msra.mxu0 0
  %517 = vmatpush.bf16.msra.mxu0 0
  %518 = vmatpush.bf16.msra.mxu0 0
  %519 = vmatpush.bf16.msra.mxu0 0
  %520 = vmatpush.bf16.msra.mxu0 0
  %521 = vmatpush.bf16.msra.mxu0 %v90
  %522 = vmatpush.bf16.msra.mxu0 %v89
  %523 = vmatmul.bf16.gmra.mxu0 %v513
  %v524 = vpop.f32.mrf.mxu0
  %v525 = vadd.f32 %v506, %v524
  %v526 = vpop.f32.mrf.mxu0
  %527 = vdwg.mxu0
  %v528 = vadd.f32 %v525, %v43
  %v529 = vxor.u32 %v528, 2147483648
  %v530 = vmul.f32 %v529, 1.442695
  %v531 = vpow.pop %v530
  %v532 = vadd.f32 %v531, 1.0
  %v533 = vrcp.pop %v532
  %v534 = vmul.f32 %v532, %v533
  %v535 = vsub.f32 1.0, %v534
  %v536 = vmul.f32 %v533, %v535
  %v537 = vadd.f32 %v533, %v536
  %vm538 = vweird.f32 %v532
  %vm539 = vweird.f32 %v533
  %vm540 = vmor %vm538, %vm539
  %v541 = vsel %vm540, %v533, %v537
  %v542 = vand.u32 2147483647, %v532
  %vm543 = vcmp.eq.f32.partialorder %v542, 8.507059e+37
  %v544 = vand.u32 %v532, 2147483648
  %v545 = vor.u32 1.1754944e-38, %v544
  %v546 = vsel %vm543, %v545, %v541
  %v547 = vmul.f32 1.0, %v546
  %v548 = vtanh.pop %v528
  %550 = vrot.lane.b32.xlu0 %v548, 32
  %v551 = vpop.permute.xlu0 %550
  %v553 = vmul.f32 %v547, %v551
  %v554 = vmul.f32 %v547, %v428
  %556 = vrot.lane.b32.xlu0 %v553, 32
  %v557 = vpop.permute.xlu0 %556
  %v559 = vadd.f32 %v554, %v557
  %v560 = vtanh.pop %v559
  %562 = vrot.lane.b32.xlu0 %v560, 32
  %v563 = vpop.permute.xlu0 %562
  %v565 = vmul.f32 %v547, %v563
  %s566 = scalar_lea.vmem %s0, 32
  %v567 = vld [vmem:[%s566] sm:$0xff]
  %568 = vmatpush.bf16.msra.mxu0 0
  %569 = vmatpush.bf16.msra.mxu0 0
  %570 = vmatpush.bf16.msra.mxu0 0
  %571 = vmatpush.bf16.msra.mxu0 0
  %572 = vmatpush.bf16.msra.mxu0 0
  %573 = vmatpush.bf16.msra.mxu0 0
  %574 = vmatpush.bf16.msra.mxu0 %v152
  %575 = vmatpush.bf16.msra.mxu0 %v151
  %576 = vmatmul.bf16.gmra.mxu0 %v513
  %v577 = vpop.f32.mrf.mxu0
  %v578 = vadd.f32 0.0, %v577
  %v579 = vpop.f32.mrf.mxu0
  %580 = vdwg.mxu0
  %v581 = vadd.f32 %v567, %v578
  %v582 = vxor.u32 %v581, 2147483648
  %v583 = vmul.f32 %v582, 1.442695
  %v584 = vpow.pop %v583
  %v585 = vadd.f32 %v584, 1.0
  %v586 = vrcp.pop %v585
  %v587 = vmul.f32 %v585, %v586
  %v588 = vsub.f32 1.0, %v587
  %v589 = vmul.f32 %v586, %v588
  %v590 = vadd.f32 %v586, %v589
  %vm591 = vweird.f32 %v585
  %vm592 = vweird.f32 %v586
  %vm593 = vmor %vm591, %vm592
  %v594 = vsel %vm593, %v586, %v590
  %v595 = vand.u32 2147483647, %v585
  %vm596 = vcmp.eq.f32.partialorder %v595, 8.507059e+37
  %v597 = vand.u32 %v585, 2147483648
  %v598 = vor.u32 1.1754944e-38, %v597
  %v599 = vsel %vm596, %v598, %v594
  %v600 = vmul.f32 1.0, %v599
  %v601 = vtanh.pop %v581
  %603 = vrot.lane.b32.xlu0 %v601, 32
  %v604 = vpop.permute.xlu0 %603
  %v606 = vmul.f32 %v600, %v604
  %v607 = vmul.f32 %v600, %v481
  %609 = vrot.lane.b32.xlu0 %v606, 32
  %v610 = vpop.permute.xlu0 %609
  %v612 = vadd.f32 %v607, %v610
  %v613 = vtanh.pop %v612
  %615 = vrot.lane.b32.xlu0 %v613, 32
  %v616 = vpop.permute.xlu0 %615
  %v618 = vmul.f32 %v600, %v616
  %v619 = vpack.c.bf16 %v618, %v618
  %v620 = vpack.c.bf16 %v565, %v565
  %622 = vrot.lane.b32.xlu0 %v620, 64
  %v623 = vpop.permute.xlu0 %622
  %v625 = vsel %vm93, %v623, 0
  %627 = vmatpush.bf16.msra.mxu0 0
  %628 = vmatpush.bf16.msra.mxu0 0
  %629 = vmatpush.bf16.msra.mxu0 0
  %630 = vmatpush.bf16.msra.mxu0 0
  %631 = vmatpush.bf16.msra.mxu0 0
  %632 = vmatpush.bf16.msra.mxu0 0
  %633 = vmatpush.bf16.msra.mxu0 %v224
  %634 = vmatpush.bf16.msra.mxu0 %v223
  %635 = vmatmul.bf16.gmra.mxu0 %v625
  %v636 = vpop.f32.mrf.mxu0
  %v637 = vadd.f32 0.0, %v636
  %v638 = vpop.f32.mrf.mxu0
  %639 = vdwg.mxu0
  %641 = vrot.lane.b32.xlu0 %v619, 64
  %v642 = vpop.permute.xlu0 %641
  %v644 = vsel %vm93, %v642, 0
  %646 = vmatpush.bf16.msra.mxu0 0
  %647 = vmatpush.bf16.msra.mxu0 0
  %648 = vmatpush.bf16.msra.mxu0 0
  %649 = vmatpush.bf16.msra.mxu0 0
  %650 = vmatpush.bf16.msra.mxu0 0
  %651 = vmatpush.bf16.msra.mxu0 0
  %652 = vmatpush.bf16.msra.mxu0 %v90
  %653 = vmatpush.bf16.msra.mxu0 %v89
  %654 = vmatmul.bf16.gmra.mxu0 %v644
  %v655 = vpop.f32.mrf.mxu0
  %v656 = vadd.f32 %v637, %v655
  %v657 = vpop.f32.mrf.mxu0
  %658 = vdwg.mxu0
  %v659 = vadd.f32 %v656, %v43
  %v660 = vxor.u32 %v659, 2147483648
  %v661 = vmul.f32 %v660, 1.442695
  %v662 = vpow.pop %v661
  %v663 = vadd.f32 %v662, 1.0
  %v664 = vrcp.pop %v663
  %v665 = vmul.f32 %v663, %v664
  %v666 = vsub.f32 1.0, %v665
  %v667 = vmul.f32 %v664, %v666
  %v668 = vadd.f32 %v664, %v667
  %vm669 = vweird.f32 %v663
  %vm670 = vweird.f32 %v664
  %vm671 = vmor %vm669, %vm670
  %v672 = vsel %vm671, %v664, %v668
  %v673 = vand.u32 2147483647, %v663
  %vm674 = vcmp.eq.f32.partialorder %v673, 8.507059e+37
  %v675 = vand.u32 %v663, 2147483648
  %v676 = vor.u32 1.1754944e-38, %v675
  %v677 = vsel %vm674, %v676, %v672
  %v678 = vmul.f32 1.0, %v677
  %v679 = vtanh.pop %v659
  %681 = vrot.lane.b32.xlu0 %v679, 32
  %v682 = vpop.permute.xlu0 %681
  %v684 = vmul.f32 %v678, %v682
  %v685 = vmul.f32 %v678, %v559
  %687 = vrot.lane.b32.xlu0 %v684, 32
  %v688 = vpop.permute.xlu0 %687
  %v690 = vadd.f32 %v685, %v688
  %v691 = vtanh.pop %v690
  %693 = vrot.lane.b32.xlu0 %v691, 32
  %v694 = vpop.permute.xlu0 %693
  %v696 = vmul.f32 %v678, %v694
  %s697 = scalar_lea.vmem %s0, 40
  %v698 = vld [vmem:[%s697] sm:$0xff]
  %699 = vmatpush.bf16.msra.mxu0 0
  %700 = vmatpush.bf16.msra.mxu0 0
  %701 = vmatpush.bf16.msra.mxu0 0
  %702 = vmatpush.bf16.msra.mxu0 0
  %703 = vmatpush.bf16.msra.mxu0 0
  %704 = vmatpush.bf16.msra.mxu0 0
  %705 = vmatpush.bf16.msra.mxu0 %v152
  %706 = vmatpush.bf16.msra.mxu0 %v151
  %707 = vmatmul.bf16.gmra.mxu0 %v644
  %v708 = vpop.f32.mrf.mxu0
  %v709 = vadd.f32 0.0, %v708
  %v710 = vpop.f32.mrf.mxu0
  %711 = vdwg.mxu0
  %v712 = vadd.f32 %v698, %v709
  %v713 = vxor.u32 %v712, 2147483648
  %v714 = vmul.f32 %v713, 1.442695
  %v715 = vpow.pop %v714
  %v716 = vadd.f32 %v715, 1.0
  %v717 = vrcp.pop %v716
  %v718 = vmul.f32 %v716, %v717
  %v719 = vsub.f32 1.0, %v718
  %v720 = vmul.f32 %v717, %v719
  %v721 = vadd.f32 %v717, %v720
  %vm722 = vweird.f32 %v716
  %vm723 = vweird.f32 %v717
  %vm724 = vmor %vm722, %vm723
  %v725 = vsel %vm724, %v717, %v721
  %v726 = vand.u32 2147483647, %v716
  %vm727 = vcmp.eq.f32.partialorder %v726, 8.507059e+37
  %v728 = vand.u32 %v716, 2147483648
  %v729 = vor.u32 1.1754944e-38, %v728
  %v730 = vsel %vm727, %v729, %v725
  %v731 = vmul.f32 1.0, %v730
  %v732 = vtanh.pop %v712
  %734 = vrot.lane.b32.xlu0 %v732, 32
  %v735 = vpop.permute.xlu0 %734
  %v737 = vmul.f32 %v731, %v735
  %v738 = vmul.f32 %v731, %v612
  %740 = vrot.lane.b32.xlu0 %v737, 32
  %v741 = vpop.permute.xlu0 %740
  %v743 = vadd.f32 %v738, %v741
  %v744 = vtanh.pop %v743
  %746 = vrot.lane.b32.xlu0 %v744, 32
  %v747 = vpop.permute.xlu0 %746
  %v749 = vmul.f32 %v731, %v747
  %v750 = vpack.c.bf16 %v749, %v749
  %v751 = vpack.c.bf16 %v696, %v696
  %753 = vrot.lane.b32.xlu0 %v751, 64
  %v754 = vpop.permute.xlu0 %753
  %v756 = vsel %vm93, %v754, 0
  %758 = vmatpush.bf16.msra.mxu0 0
  %759 = vmatpush.bf16.msra.mxu0 0
  %760 = vmatpush.bf16.msra.mxu0 0
  %761 = vmatpush.bf16.msra.mxu0 0
  %762 = vmatpush.bf16.msra.mxu0 0
  %763 = vmatpush.bf16.msra.mxu0 0
  %764 = vmatpush.bf16.msra.mxu0 %v224
  %765 = vmatpush.bf16.msra.mxu0 %v223
  %766 = vmatmul.bf16.gmra.mxu0 %v756
  %v767 = vpop.f32.mrf.mxu0
  %v768 = vadd.f32 0.0, %v767
  %v769 = vpop.f32.mrf.mxu0
  %770 = vdwg.mxu0
  %772 = vrot.lane.b32.xlu0 %v750, 64
  %v773 = vpop.permute.xlu0 %772
  %v775 = vsel %vm93, %v773, 0
  %777 = vmatpush.bf16.msra.mxu0 0
  %778 = vmatpush.bf16.msra.mxu0 0
  %779 = vmatpush.bf16.msra.mxu0 0
  %780 = vmatpush.bf16.msra.mxu0 0
  %781 = vmatpush.bf16.msra.mxu0 0
  %782 = vmatpush.bf16.msra.mxu0 0
  %783 = vmatpush.bf16.msra.mxu0 %v90
  %784 = vmatpush.bf16.msra.mxu0 %v89
  %785 = vmatmul.bf16.gmra.mxu0 %v775
  %v786 = vpop.f32.mrf.mxu0
  %v787 = vadd.f32 %v768, %v786
  %v788 = vpop.f32.mrf.mxu0
  %789 = vdwg.mxu0
  %v790 = vadd.f32 %v787, %v43
  %v791 = vxor.u32 %v790, 2147483648
  %v792 = vmul.f32 %v791, 1.442695
  %v793 = vpow.pop %v792
  %v794 = vadd.f32 %v793, 1.0
  %v795 = vrcp.pop %v794
  %v796 = vmul.f32 %v794, %v795
  %v797 = vsub.f32 1.0, %v796
  %v798 = vmul.f32 %v795, %v797
  %v799 = vadd.f32 %v795, %v798
  %vm800 = vweird.f32 %v794
  %vm801 = vweird.f32 %v795
  %vm802 = vmor %vm800, %vm801
  %v803 = vsel %vm802, %v795, %v799
  %v804 = vand.u32 2147483647, %v794
  %vm805 = vcmp.eq.f32.partialorder %v804, 8.507059e+37
  %v806 = vand.u32 %v794, 2147483648
  %v807 = vor.u32 1.1754944e-38, %v806
  %v808 = vsel %vm805, %v807, %v803
  %v809 = vmul.f32 1.0, %v808
  %v810 = vtanh.pop %v790
  %812 = vrot.lane.b32.xlu0 %v810, 32
  %v813 = vpop.permute.xlu0 %812
  %v815 = vmul.f32 %v809, %v813
  %v816 = vmul.f32 %v809, %v690
  %818 = vrot.lane.b32.xlu0 %v815, 32
  %v819 = vpop.permute.xlu0 %818
  %v821 = vadd.f32 %v816, %v819
  %v822 = vtanh.pop %v821
  %824 = vrot.lane.b32.xlu0 %v822, 32
  %v825 = vpop.permute.xlu0 %824
  %v827 = vmul.f32 %v809, %v825
  %s828 = scalar_lea.vmem %s0, 48
  %v829 = vld [vmem:[%s828] sm:$0xff]
  %830 = vmatpush.bf16.msra.mxu0 0
  %831 = vmatpush.bf16.msra.mxu0 0
  %832 = vmatpush.bf16.msra.mxu0 0
  %833 = vmatpush.bf16.msra.mxu0 0
  %834 = vmatpush.bf16.msra.mxu0 0
  %835 = vmatpush.bf16.msra.mxu0 0
  %836 = vmatpush.bf16.msra.mxu0 %v152
  %837 = vmatpush.bf16.msra.mxu0 %v151
  %838 = vmatmul.bf16.gmra.mxu0 %v775
  %v839 = vpop.f32.mrf.mxu0
  %v840 = vadd.f32 0.0, %v839
  %v841 = vpop.f32.mrf.mxu0
  %842 = vdwg.mxu0
  %v843 = vadd.f32 %v829, %v840
  %v844 = vxor.u32 %v843, 2147483648
  %v845 = vmul.f32 %v844, 1.442695
  %v846 = vpow.pop %v845
  %v847 = vadd.f32 %v846, 1.0
  %v848 = vrcp.pop %v847
  %v849 = vmul.f32 %v847, %v848
  %v850 = vsub.f32 1.0, %v849
  %v851 = vmul.f32 %v848, %v850
  %v852 = vadd.f32 %v848, %v851
  %vm853 = vweird.f32 %v847
  %vm854 = vweird.f32 %v848
  %vm855 = vmor %vm853, %vm854
  %v856 = vsel %vm855, %v848, %v852
  %v857 = vand.u32 2147483647, %v847
  %vm858 = vcmp.eq.f32.partialorder %v857, 8.507059e+37
  %v859 = vand.u32 %v847, 2147483648
  %v860 = vor.u32 1.1754944e-38, %v859
  %v861 = vsel %vm858, %v860, %v856
  %v862 = vmul.f32 1.0, %v861
  %v863 = vtanh.pop %v843
  %865 = vrot.lane.b32.xlu0 %v863, 32
  %v866 = vpop.permute.xlu0 %865
  %v868 = vmul.f32 %v862, %v866
  %v869 = vmul.f32 %v862, %v743
  %871 = vrot.lane.b32.xlu0 %v868, 32
  %v872 = vpop.permute.xlu0 %871
  %v874 = vadd.f32 %v869, %v872
  %v875 = vtanh.pop %v874
  %877 = vrot.lane.b32.xlu0 %v875, 32
  %v878 = vpop.permute.xlu0 %877
  %v880 = vmul.f32 %v862, %v878
  %v881 = vpack.c.bf16 %v880, %v880
  %v882 = vpack.c.bf16 %v827, %v827
  %884 = vrot.lane.b32.xlu0 %v882, 64
  %v885 = vpop.permute.xlu0 %884
  %v887 = vsel %vm93, %v885, 0
  %889 = vmatpush.bf16.msra.mxu0 0
  %890 = vmatpush.bf16.msra.mxu0 0
  %891 = vmatpush.bf16.msra.mxu0 0
  %892 = vmatpush.bf16.msra.mxu0 0
  %893 = vmatpush.bf16.msra.mxu0 0
  %894 = vmatpush.bf16.msra.mxu0 0
  %895 = vmatpush.bf16.msra.mxu0 %v224
  %896 = vmatpush.bf16.msra.mxu0 %v223
  %897 = vmatmul.bf16.gmra.mxu0 %v887
  %v898 = vpop.f32.mrf.mxu0
  %v899 = vadd.f32 0.0, %v898
  %v900 = vpop.f32.mrf.mxu0
  %901 = vdwg.mxu0
  %903 = vrot.lane.b32.xlu0 %v881, 64
  %v904 = vpop.permute.xlu0 %903
  %v906 = vsel %vm93, %v904, 0
  %908 = vmatpush.bf16.msra.mxu0 0
  %909 = vmatpush.bf16.msra.mxu0 0
  %910 = vmatpush.bf16.msra.mxu0 0
  %911 = vmatpush.bf16.msra.mxu0 0
  %912 = vmatpush.bf16.msra.mxu0 0
  %913 = vmatpush.bf16.msra.mxu0 0
  %914 = vmatpush.bf16.msra.mxu0 %v90
  %915 = vmatpush.bf16.msra.mxu0 %v89
  %916 = vmatmul.bf16.gmra.mxu0 %v906
  %v917 = vpop.f32.mrf.mxu0
  %v918 = vadd.f32 %v899, %v917
  %v919 = vpop.f32.mrf.mxu0
  %920 = vdwg.mxu0
  %v921 = vadd.f32 %v918, %v43
  %v922 = vxor.u32 %v921, 2147483648
  %v923 = vmul.f32 %v922, 1.442695
  %v924 = vpow.pop %v923
  %v925 = vadd.f32 %v924, 1.0
  %v926 = vrcp.pop %v925
  %v927 = vmul.f32 %v925, %v926
  %v928 = vsub.f32 1.0, %v927
  %v929 = vmul.f32 %v926, %v928
  %v930 = vadd.f32 %v926, %v929
  %vm931 = vweird.f32 %v925
  %vm932 = vweird.f32 %v926
  %vm933 = vmor %vm931, %vm932
  %v934 = vsel %vm933, %v926, %v930
  %v935 = vand.u32 2147483647, %v925
  %vm936 = vcmp.eq.f32.partialorder %v935, 8.507059e+37
  %v937 = vand.u32 %v925, 2147483648
  %v938 = vor.u32 1.1754944e-38, %v937
  %v939 = vsel %vm936, %v938, %v934
  %v940 = vmul.f32 1.0, %v939
  %v941 = vtanh.pop %v921
  %943 = vrot.lane.b32.xlu0 %v941, 32
  %v944 = vpop.permute.xlu0 %943
  %v946 = vmul.f32 %v940, %v944
  %v947 = vmul.f32 %v940, %v821
  %949 = vrot.lane.b32.xlu0 %v946, 32
  %v950 = vpop.permute.xlu0 %949
  %v952 = vadd.f32 %v947, %v950
  %v953 = vtanh.pop %v952
  %955 = vrot.lane.b32.xlu0 %v953, 32
  %v956 = vpop.permute.xlu0 %955
  %v958 = vmul.f32 %v940, %v956
  %s959 = scalar_lea.vmem %s0, 56
  %v960 = vld [vmem:[%s959] sm:$0xff]
  %961 = vmatpush.bf16.msra.mxu0 0
  %962 = vmatpush.bf16.msra.mxu0 0
  %963 = vmatpush.bf16.msra.mxu0 0
  %964 = vmatpush.bf16.msra.mxu0 0
  %965 = vmatpush.bf16.msra.mxu0 0
  %966 = vmatpush.bf16.msra.mxu0 0
  %967 = vmatpush.bf16.msra.mxu0 %v152
  %968 = vmatpush.bf16.msra.mxu0 %v151
  %969 = vmatmul.bf16.gmra.mxu0 %v906
  %v970 = vpop.f32.mrf.mxu0
  %v971 = vadd.f32 0.0, %v970
  %v972 = vpop.f32.mrf.mxu0
  %973 = vdwg.mxu0
  %v974 = vadd.f32 %v960, %v971
  %v975 = vxor.u32 %v974, 2147483648
  %v976 = vmul.f32 %v975, 1.442695
  %v977 = vpow.pop %v976
  %v978 = vadd.f32 %v977, 1.0
  %v979 = vrcp.pop %v978
  %v980 = vmul.f32 %v978, %v979
  %v981 = vsub.f32 1.0, %v980
  %v982 = vmul.f32 %v979, %v981
  %v983 = vadd.f32 %v979, %v982
  %vm984 = vweird.f32 %v978
  %vm985 = vweird.f32 %v979
  %vm986 = vmor %vm984, %vm985
  %v987 = vsel %vm986, %v979, %v983
  %v988 = vand.u32 2147483647, %v978
  %vm989 = vcmp.eq.f32.partialorder %v988, 8.507059e+37
  %v990 = vand.u32 %v978, 2147483648
  %v991 = vor.u32 1.1754944e-38, %v990
  %v992 = vsel %vm989, %v991, %v987
  %v993 = vmul.f32 1.0, %v992
  %v994 = vtanh.pop %v974
  %996 = vrot.lane.b32.xlu0 %v994, 32
  %v997 = vpop.permute.xlu0 %996
  %v999 = vmul.f32 %v993, %v997
  %v1000 = vmul.f32 %v993, %v874
  %1002 = vrot.lane.b32.xlu0 %v999, 32
  %v1003 = vpop.permute.xlu0 %1002
  %v1005 = vadd.f32 %v1000, %v1003
  %v1006 = vtanh.pop %v1005
  %1008 = vrot.lane.b32.xlu0 %v1006, 32
  %v1009 = vpop.permute.xlu0 %1008
  %v1011 = vmul.f32 %v993, %v1009
  %v1012 = vpack.c.bf16 %v1011, %v1011
  %v1013 = vpack.c.bf16 %v958, %v958
  %1015 = vrot.lane.b32.xlu0 %v1013, 64
  %v1016 = vpop.permute.xlu0 %1015
  %v1018 = vsel %vm93, %v1016, 0
  %1020 = vmatpush.bf16.msra.mxu0 0
  %1021 = vmatpush.bf16.msra.mxu0 0
  %1022 = vmatpush.bf16.msra.mxu0 0
  %1023 = vmatpush.bf16.msra.mxu0 0
  %1024 = vmatpush.bf16.msra.mxu0 0
  %1025 = vmatpush.bf16.msra.mxu0 0
  %1026 = vmatpush.bf16.msra.mxu0 %v224
  %1027 = vmatpush.bf16.msra.mxu0 %v223
  %1028 = vmatmul.bf16.gmra.mxu0 %v1018
  %v1029 = vpop.f32.mrf.mxu0
  %v1030 = vadd.f32 0.0, %v1029
  %v1031 = vpop.f32.mrf.mxu0
  %1032 = vdwg.mxu0
  %1034 = vrot.lane.b32.xlu0 %v1012, 64
  %v1035 = vpop.permute.xlu0 %1034
  %v1037 = vsel %vm93, %v1035, 0
  %1039 = vmatpush.bf16.msra.mxu0 0
  %1040 = vmatpush.bf16.msra.mxu0 0
  %1041 = vmatpush.bf16.msra.mxu0 0
  %1042 = vmatpush.bf16.msra.mxu0 0
  %1043 = vmatpush.bf16.msra.mxu0 0
  %1044 = vmatpush.bf16.msra.mxu0 0
  %1045 = vmatpush.bf16.msra.mxu0 %v90
  %1046 = vmatpush.bf16.msra.mxu0 %v89
  %1047 = vmatmul.bf16.gmra.mxu0 %v1037
  %v1048 = vpop.f32.mrf.mxu0
  %v1049 = vadd.f32 %v1030, %v1048
  %v1050 = vpop.f32.mrf.mxu0
  %1051 = vdwg.mxu0
  %v1052 = vadd.f32 %v1049, %v43
  %v1053 = vxor.u32 %v1052, 2147483648
  %v1054 = vmul.f32 %v1053, 1.442695
  %v1055 = vpow.pop %v1054
  %v1056 = vadd.f32 %v1055, 1.0
  %v1057 = vrcp.pop %v1056
  %v1058 = vmul.f32 %v1056, %v1057
  %v1059 = vsub.f32 1.0, %v1058
  %v1060 = vmul.f32 %v1057, %v1059
  %v1061 = vadd.f32 %v1057, %v1060
  %vm1062 = vweird.f32 %v1056
  %vm1063 = vweird.f32 %v1057
  %vm1064 = vmor %vm1062, %vm1063
  %v1065 = vsel %vm1064, %v1057, %v1061
  %v1066 = vand.u32 2147483647, %v1056
  %vm1067 = vcmp.eq.f32.partialorder %v1066, 8.507059e+37
  %v1068 = vand.u32 %v1056, 2147483648
  %v1069 = vor.u32 1.1754944e-38, %v1068
  %v1070 = vsel %vm1067, %v1069, %v1065
  %v1071 = vmul.f32 1.0, %v1070
  %v1072 = vtanh.pop %v1052
  %1074 = vrot.lane.b32.xlu0 %v1072, 32
  %v1075 = vpop.permute.xlu0 %1074
  %v1077 = vmul.f32 %v1071, %v1075
  %v1078 = vmul.f32 %v1071, %v952
  %1080 = vrot.lane.b32.xlu0 %v1077, 32
  %v1081 = vpop.permute.xlu0 %1080
  %v1083 = vadd.f32 %v1078, %v1081
  %v1084 = vtanh.pop %v1083
  %1086 = vrot.lane.b32.xlu0 %v1084, 32
  %v1087 = vpop.permute.xlu0 %1086
  %v1089 = vmul.f32 %v1071, %v1087
  %v1090 = vld [vmem:[%s5] sm:$0x1]
  %v1092 = vperm.slane %v1090, 0
  %1093 = vrot.lane.b32.xlu0 %v1092, 64
  %v1094 = vpop.permute.xlu0 %1093
  %v1096 = vmul.f32 %v1089, %v1094
  %1098 = vrot.lane.b32.xlu0 %v1096, 64
  %v1099 = vpop.permute.xlu0 %1098
  %v1101 = vsel %vm93, %v1099, 0.0
  %1102 = vadd.xlane.f32.xlu0 %v1101
  %v1103 = vpop.xlane.xlu0 %1102
  %v1104 = vstv %s40
  %v1105 = vadd.f32 %v1103, %v1104
  %1106 = vxpose.xlu0.b32.start [1/16] %v1105, 128
  %1107 = vxpose.xlu0.b32.cont [2/16] 0.0, 128
  %1108 = vxpose.xlu0.b32.cont [3/16] 0.0, 128
  %1109 = vxpose.xlu0.b32.cont [4/16] 0.0, 128
  %1110 = vxpose.xlu0.b32.cont [5/16] 0.0, 128
  %1111 = vxpose.xlu0.b32.cont [6/16] 0.0, 128
  %1112 = vxpose.xlu0.b32.cont [7/16] 0.0, 128
  %1113 = vxpose.xlu0.b32.cont [8/16] 0.0, 128
  %1114 = vxpose.xlu0.b32.cont [9/16] 0.0, 128
  %1115 = vxpose.xlu0.b32.cont [10/16] 0.0, 128
  %1116 = vxpose.xlu0.b32.cont [11/16] 0.0, 128
  %1117 = vxpose.xlu0.b32.cont [12/16] 0.0, 128
  %1118 = vxpose.xlu0.b32.cont [13/16] 0.0, 128
  %1119 = vxpose.xlu0.b32.cont [14/16] 0.0, 128
  %1120 = vxpose.xlu0.b32.cont [15/16] 0.0, 128
  %1121 = vxpose.xlu0.b32.end [16/16] 0.0, 128
  %v1122 = vpop.trf.xlu0
  %v1123 = vpop.trf.xlu0
  %v1124 = vpop.trf.xlu0
  %v1125 = vpop.trf.xlu0
  %v1126 = vpop.trf.xlu0
  %v1127 = vpop.trf.xlu0
  %v1128 = vpop.trf.xlu0
  %v1129 = vpop.trf.xlu0
  %v1130 = vpop.trf.xlu0
  %v1131 = vpop.trf.xlu0
  %v1132 = vpop.trf.xlu0
  %v1133 = vpop.trf.xlu0
  %v1134 = vpop.trf.xlu0
  %v1135 = vpop.trf.xlu0
  %v1136 = vpop.trf.xlu0
  %v1137 = vpop.trf.xlu0
  %vm1138 = vcmask 57344
  %1139 = vst.msk [vmem:[%s7] sm:$0x1] %vm1138, %v1122
  // Predicated region
  $region30: #{nba_projection_forward.1} parent=0 // pred_check
    _
  $region31: #{nba_projection_forward.1} parent=0 // pred_check_branch
    %1141 = sbr.rel (0) target = $region33
  $region32: #{nba_projection_forward.1} parent=0 // pred_region
    _
  $region33: #{nba_projection_forward.1} parent=0 // pred_fallthru
    _
  // Predicated region
  $region34: #{nba_projection_forward.1} parent=0 // pred_check
    _
  $region35: #{nba_projection_forward.1} parent=0 // pred_check_branch
    %1143 = sbr.rel (0) target = $region37
  $region36: #{nba_projection_forward.1} parent=0 // pred_region
    _
  $region37: #{nba_projection_forward.1} parent=0 // pred_fallthru
    _

</llo_original>
